<compile_context>
chip_gen: v6e
topology: v6e:2x2x1
jax: 0.10.0
libtpu: 0.0.40
codegen_flags: <defaults>
</compile_context>

<pallas_src>
import jax
import jax.numpy as jnp
from jax.experimental import pallas as pl
from jax.experimental.pallas import tpu as pltpu


def autoencoder_kernel(x_ref, w1_ref, b1_ref, w2_ref, b2_ref, o_ref):
    # Encoder: Linear(dim -> enc) + ReLU.  bf16 MXU operands, f32 accumulate.
    x_bf = x_ref[...].astype(jnp.bfloat16)
    h = jnp.dot(x_bf, w1_ref[...], preferred_element_type=jnp.float32)
    h = jnp.maximum(h + b1_ref[...], 0.0)          # f32 epilogue
    # Decoder: Linear(enc -> dim) + Sigmoid.  bf16 MXU operands, f32 accumulate.
    y = jnp.dot(h.astype(jnp.bfloat16), w2_ref[...], preferred_element_type=jnp.float32)
    y = jax.nn.sigmoid(y + b2_ref[...])            # f32 epilogue
    o_ref[...] = y.astype(o_ref.dtype)


def autoencoder_forward(x, w1, b1, w2, b2, *, block_rows=None):
    """x: (B, dim); w1: (dim, enc); b1: (1, enc); w2: (enc, dim); b2: (1, dim)."""
    B, dim = x.shape
    enc = w1.shape[1]

    # bf16 storage for the MXU operands; biases stay f32 for the epilogue.
    w1_bf = w1.astype(jnp.bfloat16)
    w2_bf = w2.astype(jnp.bfloat16)
    b1_f32 = b1.astype(jnp.float32)
    b2_f32 = b2.astype(jnp.float32)

    # Batch-tile size: 512 rows when the batch is large (amortizes the ~0.35us
    # per-grid-step overhead, ~85% of HBM roofline territory), otherwise round
    # the whole batch up to a multiple of 8 sublanes.
    if block_rows is None:
        block_rows = 512 if B >= 512 else max(8, ((B + 7) // 8) * 8)
    tm = block_rows

    b_pad = ((B + tm - 1) // tm) * tm
    x_in = x if b_pad == B else jnp.pad(x, ((0, b_pad - B), (0, 0)))
    n_tiles = b_pad // tm

    # Advisory cost estimate for XLA's scheduler.
    bytes_accessed = (
        x_in.size * x_in.dtype.itemsize          # x read
        + w1_bf.size * 2 + w2_bf.size * 2        # bf16 weights
        + b1_f32.size * 4 + b2_f32.size * 4      # f32 biases
        + b_pad * dim * x.dtype.itemsize         # output write
    )
    cost = pl.CostEstimate(
        flops=2 * 2 * b_pad * dim * enc,         # two matmuls
        transcendentals=b_pad * dim,             # sigmoid exp
        bytes_accessed=bytes_accessed,
    )

    # VMEM budget: double-buffered x/out tiles (f32) + double-buffered bf16
    # weights + biases, with generous headroom for in-kernel temporaries.
    # Capped well under v7x's 64 MiB physical VMEM.
    vmem_bytes = (
        2 * 2 * tm * dim * 4                     # x + out tiles, double-buffered
        + 2 * 2 * (dim * enc + enc * dim)        # bf16 weights, double-buffered
        + 2 * 4 * (enc + dim)                    # f32 biases
    )
    vmem_limit = int(min(max(4 * vmem_bytes, 16 << 20), 48 << 20))

    out = pl.pallas_call(
        autoencoder_kernel,
        out_shape=jax.ShapeDtypeStruct((b_pad, dim), x.dtype),
        grid_spec=pl.GridSpec(
            grid=(n_tiles,),
            in_specs=[
                pl.BlockSpec((tm, dim), lambda i: (i, 0)),      # x: tiled over batch
                pl.BlockSpec((dim, enc), lambda i: (0, 0)),     # w1: resident
                pl.BlockSpec((1, enc), lambda i: (0, 0)),       # b1: resident
                pl.BlockSpec((enc, dim), lambda i: (0, 0)),     # w2: resident
                pl.BlockSpec((1, dim), lambda i: (0, 0)),       # b2: resident
            ],
            out_specs=pl.BlockSpec((tm, dim), lambda i: (i, 0)),
        ),
        compiler_params=pltpu.CompilerParams(
            dimension_semantics=("parallel",),   # shard batch tiles across TCs (v7x)
            vmem_limit_bytes=vmem_limit,
        ),
        cost_estimate=cost,
    )(x_in, w1_bf, b1_f32, w2_bf, b2_f32)

    return out if b_pad == B else out[:B]


def init_params(key, dim, encoding_dim):
    """Deterministic init matching PyTorch Linear default: U(-1/sqrt(fan_in), 1/sqrt(fan_in))."""
    k1, k2, k3, k4 = jax.random.split(key, 4)
    bound1 = 1.0 / jnp.sqrt(dim)
    bound2 = 1.0 / jnp.sqrt(encoding_dim)
    # Stored pre-transposed: (in_features, out_features)
    w1 = jax.random.uniform(k1, (dim, encoding_dim), jnp.float32, -bound1, bound1)
    b1 = jax.random.uniform(k2, (1, encoding_dim), jnp.float32, -bound1, bound1)
    w2 = jax.random.uniform(k3, (encoding_dim, dim), jnp.float32, -bound2, bound2)
    b2 = jax.random.uniform(k4, (1, dim), jnp.float32, -bound2, bound2)
    return w1, b1, w2, b2


if __name__ == "__main__":
    batch, dim, encoding_dim = 1024, 128, 32   # grid=(2,) with TM=512 -> pipelining exercised

    key = jax.random.PRNGKey(0)
    kx, kp = jax.random.split(key)
    x = jax.random.uniform(kx, (batch, dim), jnp.float32)
    w1, b1, w2, b2 = init_params(kp, dim, encoding_dim)

    out = autoencoder_forward(x, w1, b1, w2, b2)
    jax.block_until_ready(out)

    # Reference in plain JAX, applying the same bf16 operand rounding as the kernel.
    w1_bf = w1.astype(jnp.bfloat16).astype(jnp.float32)
    w2_bf = w2.astype(jnp.bfloat16).astype(jnp.float32)
    x_bf = x.astype(jnp.bfloat16).astype(jnp.float32)
    h_ref = jnp.maximum(x_bf @ w1_bf + b1, 0.0)
    ref = jax.nn.sigmoid(h_ref.astype(jnp.bfloat16).astype(jnp.float32) @ w2_bf + b2)

    assert out.shape == (batch, dim)
    assert jnp.allclose(out, ref, atol=2e-2, rtol=2e-2), float(jnp.max(jnp.abs(out - ref)))

    print("KERNEL_OK")
</pallas_src>

<mosaic_0001>
module attributes {stable_mosaic.version = 11 : i64} {
  func.func @autoencoder_kernel(%arg0: i32, %arg1: memref<512x128xf32, #tpu.memory_space<vmem>>, %arg2: memref<128x32xbf16, #tpu.memory_space<vmem>>, %arg3: memref<1x32xf32, #tpu.memory_space<vmem>>, %arg4: memref<32x128xbf16, #tpu.memory_space<vmem>>, %arg5: memref<1x128xf32, #tpu.memory_space<vmem>>, %arg6: memref<512x128xf32, #tpu.memory_space<vmem>>) attributes {dimension_semantics = [#tpu.dimension_semantics<parallel>], iteration_bounds = array<i64: 2>, scalar_prefetch = 0 : i64, scratch_operands = 0 : i64, tpu.core_type = #tpu.core_type<tc>, window_params = [{transform_indices = @transform_0, window_bounds = array<i64: 512, 128>}, {pipeline_mode = #tpu.pipeline_mode<synchronous>, transform_indices = @transform_1, window_bounds = array<i64: 128, 32>}, {pipeline_mode = #tpu.pipeline_mode<synchronous>, transform_indices = @transform_2, window_bounds = array<i64: 1, 32>}, {pipeline_mode = #tpu.pipeline_mode<synchronous>, transform_indices = @transform_3, window_bounds = array<i64: 32, 128>}, {pipeline_mode = #tpu.pipeline_mode<synchronous>, transform_indices = @transform_4, window_bounds = array<i64: 1, 128>}, {transform_indices = @transform_5, window_bounds = array<i64: 512, 128>}]} {
    %c0 = arith.constant 0 : index
    %c0_0 = arith.constant 0 : index
    %0 = vector.load %arg1[%c0, %c0_0] : memref<512x128xf32, #tpu.memory_space<vmem>>, vector<512x128xf32>
    %1 = arith.truncf %0 : vector<512x128xf32> to vector<512x128xbf16>
    %c0_1 = arith.constant 0 : index
    %c0_2 = arith.constant 0 : index
    %2 = vector.load %arg2[%c0_1, %c0_2] : memref<128x32xbf16, #tpu.memory_space<vmem>>, vector<128x32xbf16>
    %cst = arith.constant dense<0.000000e+00> : vector<512x32xf32>
    %3 = tpu.matmul %1, %2, %cst {dimension_numbers = #tpu.dot_dimension_numbers<[1], [0], [0], [1], [0, 0, 1, 1], [], []>} : vector<512x128xbf16>, vector<128x32xbf16>, vector<512x32xf32> -> vector<512x32xf32>
    %c0_3 = arith.constant 0 : index
    %c0_4 = arith.constant 0 : index
    %4 = vector.load %arg3[%c0_3, %c0_4] : memref<1x32xf32, #tpu.memory_space<vmem>>, vector<1x32xf32>
    %5 = vector.broadcast %4 : vector<1x32xf32> to vector<512x32xf32>
    %6 = arith.addf %3, %5 : vector<512x32xf32>
    %cst_5 = arith.constant 0.000000e+00 : f32
    %7 = vector.broadcast %cst_5 : f32 to vector<512x32xf32>
    %8 = arith.maximumf %6, %7 : vector<512x32xf32>
    %9 = arith.truncf %8 : vector<512x32xf32> to vector<512x32xbf16>
    %c0_6 = arith.constant 0 : index
    %c0_7 = arith.constant 0 : index
    %10 = vector.load %arg4[%c0_6, %c0_7] : memref<32x128xbf16, #tpu.memory_space<vmem>>, vector<32x128xbf16>
    %cst_8 = arith.constant dense<0.000000e+00> : vector<512x128xf32>
    %11 = tpu.matmul %9, %10, %cst_8 {dimension_numbers = #tpu.dot_dimension_numbers<[1], [0], [0], [1], [0, 0, 1, 1], [], []>} : vector<512x32xbf16>, vector<32x128xbf16>, vector<512x128xf32> -> vector<512x128xf32>
    %c0_9 = arith.constant 0 : index
    %c0_10 = arith.constant 0 : index
    %12 = vector.load %arg5[%c0_9, %c0_10] : memref<1x128xf32, #tpu.memory_space<vmem>>, vector<1x128xf32>
    %13 = vector.broadcast %12 : vector<1x128xf32> to vector<512x128xf32>
    %14 = arith.addf %11, %13 : vector<512x128xf32>
    %15 = arith.negf %14 : vector<512x128xf32>
    %16 = math.exp %15 : vector<512x128xf32>
    %cst_11 = arith.constant 1.000000e+00 : f32
    %17 = vector.broadcast %cst_11 : f32 to vector<512x128xf32>
    %18 = arith.addf %17, %16 : vector<512x128xf32>
    %19 = arith.divf %17, %18 : vector<512x128xf32>
    %c0_12 = arith.constant 0 : index
    %c0_13 = arith.constant 0 : index
    %20 = vector.load %arg6[%c0_12, %c0_13] : memref<512x128xf32, #tpu.memory_space<vmem>>, vector<512x128xf32>
    tpu.vector_store %arg6[%c0_12, %c0_13], %19 {strides = array<i32>} : memref<512x128xf32, #tpu.memory_space<vmem>>, vector<512x128xf32>,
    return
  }
  func.func @transform_0(%arg0: i32) -> (i32, i32) {
    %c0_i32 = arith.constant 0 : i32
    %c0_i32_0 = arith.constant 0 : i32
    return %arg0, %c0_i32 : i32, i32
  }
  func.func @transform_1(%arg0: i32) -> (i32, i32) {
    %c0_i32 = arith.constant 0 : i32
    %c0_i32_0 = arith.constant 0 : i32
    %c0_i32_1 = arith.constant 0 : i32
    return %c0_i32, %c0_i32_0 : i32, i32
  }
  func.func @transform_2(%arg0: i32) -> (i32, i32) {
    %c0_i32 = arith.constant 0 : i32
    %c0_i32_0 = arith.constant 0 : i32
    %c0_i32_1 = arith.constant 0 : i32
    return %c0_i32, %c0_i32_0 : i32, i32
  }
  func.func @transform_3(%arg0: i32) -> (i32, i32) {
    %c0_i32 = arith.constant 0 : i32
    %c0_i32_0 = arith.constant 0 : i32
    %c0_i32_1 = arith.constant 0 : i32
    return %c0_i32, %c0_i32_0 : i32, i32
  }
  func.func @transform_4(%arg0: i32) -> (i32, i32) {
    %c0_i32 = arith.constant 0 : i32
    %c0_i32_0 = arith.constant 0 : i32
    %c0_i32_1 = arith.constant 0 : i32
    return %c0_i32, %c0_i32_0 : i32, i32
  }
  func.func @transform_5(%arg0: i32) -> (i32, i32) {
    %c0_i32 = arith.constant 0 : i32
    %c0_i32_0 = arith.constant 0 : i32
    return %arg0, %c0_i32 : i32, i32
  }
}

</mosaic_0001>

<llo_original>
// kernel: tpu_custom_call.1
$region0: #{tpu_custom_call.1}
  #allocation0 [shape = 'u32[]', space=smem, size = 0x4, offset = 0x4, fixed_abs, tag = 'smem constant byte address 0x4 - core index']
  #allocation1 [shape = 'u32[144,128]{1,0:T(1,128)}', space=vmem, size = 0x12000, scoped, tag = 'internal scratch']
  %s0 = inlined_call_operand.hbm [shape: f32[1024,128], index: 0, kind: input, shape index: {}]
  %s1 = inlined_call_operand.vmem [shape: bf16[128,32], index: 1, kind: input, shape index: {}]
  %s2 = inlined_call_operand.vmem [shape: f32[1,32], index: 2, kind: input, shape index: {}]
  %s3 = inlined_call_operand.vmem [shape: bf16[32,128], index: 3, kind: input, shape index: {}]
  %s4 = inlined_call_operand.vmem [shape: f32[1,128], index: 4, kind: input, shape index: {}]
  %s5 = inlined_call_operand.hbm [shape: f32[1024,128], index: 5, kind: output, shape index: {}]
  %s6 = sld [smem:[#allocation0]]
  $region57: #{tpu_custom_call.1} parent=0
    _
  %s8 = ssub.s32 1, %s6
  %s9 = scalar_select 0, %s8, %s6
  $region1: #{tpu_custom_call.1} parent=0
    #allocation2 [shape = 'u8[524288]{0}', space=vmem, size = 0x80000, scoped, tag = 'input window, operand 0']
    #allocation3 [shape = 's32[2]{0}', space=sflag, size = 0x8, scoped, tag = 'scoped memory for tpu_custom_call.1']
    #allocation4 [shape = 's32[2]{0}', space=sflag, size = 0x8, scoped, tag = 'scoped memory for tpu_custom_call.1']
    #allocation5 [shape = 'u8[524288]{0}', space=vmem, size = 0x80000, scoped, tag = 'output window, operand 0']
    %10 = vsyncpa [#allocation3], 0
    %s11 = scalar_lea.sflag [#allocation3], 1
    %12 = vsyncpa %s11, 0
    %13 = vsyncpa [#allocation4], 0
    %s14 = scalar_lea.sflag [#allocation4], 1
    %15 = vsyncpa %s14, 0
    loop: start=0, step=1, limit=4
    $region2: #{tpu_custom_call.1} parent=1 // loop_pre_header
      _
    $region3: #{tpu_custom_call.1} parent=1 // loop_header
      %s17 = sphi 0, %s21
      %p18 = scmp.ge.s32.totalorder %s17, 4
      %s27 = sphi 0, %s29
      %s30 = sphi 0, %s27
      %s31 = sphi 0, %s30
      %s47 = sphi 0, %s31
      %s51 = sphi 0, %s51
      %s53 = sphi 0, %s51
      %s54 = sphi 0, %s53
      %s68 = sphi 0, %s54
      %s72 = sphi 0, %s72
      %s74 = sphi 0, %s72
      %s75 = sphi 0, %s74
      %s89 = sphi 0, %s75
      %s93 = sphi 0, %s93
      %s95 = sphi 0, %s93
      %s96 = sphi 0, %s95
      %s110 = sphi 0, %s96
      %s114 = sphi 0, %s114
      %s116 = sphi 0, %s114
      %s117 = sphi 0, %s116
      %s131 = sphi 0, %s117
      %s137 = sphi 0, %s139
      %s140 = sphi 0, %s137
      %s141 = sphi 0, %s140
      %s157 = sphi 0, %s141
    $region4: #{tpu_custom_call.1} parent=1 // loop_header_branch
      %20 = sbr.rel (%p18) target = $region8
    $region5: #{tpu_custom_call.1} parent=1 // loop_body
      %s22 = ssub.s32 %s17, 1
      %s23 = ssub.s32 %s17, 2
      %s24 = sadd.s32 %s17, 1
      %s25 = ssub.s32 %s17, %s24
      %p26 = scmp.eq.s32.totalorder %s25, 0
      %s28 = sadd.s32 %s27, 1
      %s29 = scalar_select %p26, %s27, %s28
      %p32 = pneg %p26
      %p33 = scmp.eq.s32.totalorder %s17, 1
      %p34 = por %p32, %p33
      %p35 = scmp.ne.s32.totalorder %s27, %s30
      %p36 = scmp.eq.s32.totalorder %s17, 0
      %p37 = por %p35, %p36
      %p38 = scmp.ne.s32.totalorder %s27, %s30
      %p39 = scmp.eq.s32.totalorder %s22, 1
      %p40 = por %p38, %p39
      %p41 = scmp.ne.s32.totalorder %s30, %s31
      %p42 = scmp.eq.s32.totalorder %s22, 0
      %p43 = por %p41, %p42
      %p44 = scmp.ne.s32.totalorder %s30, %s31
      %p45 = scmp.eq.s32.totalorder %s23, 1
      %p46 = por %p44, %p45
      %p48 = scmp.ne.s32.totalorder %s31, %s47
      %p49 = scmp.eq.s32.totalorder %s23, 0
      %p50 = por %p48, %p49
      %s52 = sadd.s32 %s51, 1
      %p55 = scmp.eq.s32.totalorder %s17, 1
      %p56 = scmp.ne.s32.totalorder %s51, %s53
      %p57 = scmp.eq.s32.totalorder %s17, 0
      %p58 = por %p56, %p57
      %p59 = scmp.ne.s32.totalorder %s51, %s53
      %p60 = scmp.eq.s32.totalorder %s22, 1
      %p61 = por %p59, %p60
      %p62 = scmp.ne.s32.totalorder %s53, %s54
      %p63 = scmp.eq.s32.totalorder %s22, 0
      %p64 = por %p62, %p63
      %p65 = scmp.ne.s32.totalorder %s53, %s54
      %p66 = scmp.eq.s32.totalorder %s23, 1
      %p67 = por %p65, %p66
      %p69 = scmp.ne.s32.totalorder %s54, %s68
      %p70 = scmp.eq.s32.totalorder %s23, 0
      %p71 = por %p69, %p70
      %s73 = sadd.s32 %s72, 1
      %p76 = scmp.eq.s32.totalorder %s17, 1
      %p77 = scmp.ne.s32.totalorder %s72, %s74
      %p78 = scmp.eq.s32.totalorder %s17, 0
      %p79 = por %p77, %p78
      %p80 = scmp.ne.s32.totalorder %s72, %s74
      %p81 = scmp.eq.s32.totalorder %s22, 1
      %p82 = por %p80, %p81
      %p83 = scmp.ne.s32.totalorder %s74, %s75
      %p84 = scmp.eq.s32.totalorder %s22, 0
      %p85 = por %p83, %p84
      %p86 = scmp.ne.s32.totalorder %s74, %s75
      %p87 = scmp.eq.s32.totalorder %s23, 1
      %p88 = por %p86, %p87
      %p90 = scmp.ne.s32.totalorder %s75, %s89
      %p91 = scmp.eq.s32.totalorder %s23, 0
      %p92 = por %p90, %p91
      %s94 = sadd.s32 %s93, 1
      %p97 = scmp.eq.s32.totalorder %s17, 1
      %p98 = scmp.ne.s32.totalorder %s93, %s95
      %p99 = scmp.eq.s32.totalorder %s17, 0
      %p100 = por %p98, %p99
      %p101 = scmp.ne.s32.totalorder %s93, %s95
      %p102 = scmp.eq.s32.totalorder %s22, 1
      %p103 = por %p101, %p102
      %p104 = scmp.ne.s32.totalorder %s95, %s96
      %p105 = scmp.eq.s32.totalorder %s22, 0
      %p106 = por %p104, %p105
      %p107 = scmp.ne.s32.totalorder %s95, %s96
      %p108 = scmp.eq.s32.totalorder %s23, 1
      %p109 = por %p107, %p108
      %p111 = scmp.ne.s32.totalorder %s96, %s110
      %p112 = scmp.eq.s32.totalorder %s23, 0
      %p113 = por %p111, %p112
      %s115 = sadd.s32 %s114, 1
      %p118 = scmp.eq.s32.totalorder %s17, 1
      %p119 = scmp.ne.s32.totalorder %s114, %s116
      %p120 = scmp.eq.s32.totalorder %s17, 0
      %p121 = por %p119, %p120
      %p122 = scmp.ne.s32.totalorder %s114, %s116
      %p123 = scmp.eq.s32.totalorder %s22, 1
      %p124 = por %p122, %p123
      %p125 = scmp.ne.s32.totalorder %s116, %s117
      %p126 = scmp.eq.s32.totalorder %s22, 0
      %p127 = por %p125, %p126
      %p128 = scmp.ne.s32.totalorder %s116, %s117
      %p129 = scmp.eq.s32.totalorder %s23, 1
      %p130 = por %p128, %p129
      %p132 = scmp.ne.s32.totalorder %s117, %s131
      %p133 = scmp.eq.s32.totalorder %s23, 0
      %p134 = por %p132, %p133
      %s135 = ssub.s32 %s17, %s24
      %p136 = scmp.eq.s32.totalorder %s135, 0
      %s138 = sadd.s32 %s137, 1
      %s139 = scalar_select %p136, %s137, %s138
      %p142 = pneg %p136
      %p143 = scmp.eq.s32.totalorder %s17, 1
      %p144 = por %p142, %p143
      %p145 = scmp.ne.s32.totalorder %s137, %s140
      %p146 = scmp.eq.s32.totalorder %s17, 0
      %p147 = por %p145, %p146
      %p148 = scmp.ne.s32.totalorder %s137, %s140
      %p149 = scmp.eq.s32.totalorder %s22, 1
      %p150 = por %p148, %p149
      %p151 = scmp.ne.s32.totalorder %s140, %s141
      %p152 = scmp.eq.s32.totalorder %s22, 0
      %p153 = por %p151, %p152
      %p154 = scmp.ne.s32.totalorder %s140, %s141
      %p155 = scmp.eq.s32.totalorder %s23, 1
      %p156 = por %p154, %p155
      %p158 = scmp.ne.s32.totalorder %s141, %s157
      %p159 = scmp.eq.s32.totalorder %s23, 0
      %p160 = por %p158, %p159
      %p161 = scmp.le.s32.totalorder 1, %s17
      %p162 = scmp.lt.s32.totalorder %s17, 3
      %p163 = pnand %p161, %p162
      %p164 = pneg %p163
      // Predicated region
      $region9: #{tpu_custom_call.1} parent=5 // pred_check
        _
      $region10: #{tpu_custom_call.1} parent=5 // pred_check_branch
        %166 = sbr.rel (%p163) target = $region12
      $region11: #{tpu_custom_call.1} parent=5 // pred_region
        %s167 = ssub.s32 %s17, 1
        // Predicated region
        $region13: #{tpu_custom_call.1} parent=11 // pred_check
          %p168 = pneg %p64
        $region14: #{tpu_custom_call.1} parent=11 // pred_check_branch
          %170 = sbr.rel (%p168) target = $region16
        $region15: #{tpu_custom_call.1} parent=11 // pred_region
          _
        $region16: #{tpu_custom_call.1} parent=11 // pred_fallthru
          _
        // Predicated region
        $region17: #{tpu_custom_call.1} parent=11 // pred_check
          %p171 = pneg %p85
        $region18: #{tpu_custom_call.1} parent=11 // pred_check_branch
          %173 = sbr.rel (%p171) target = $region20
        $region19: #{tpu_custom_call.1} parent=11 // pred_region
          _
        $region20: #{tpu_custom_call.1} parent=11 // pred_fallthru
          _
        // Predicated region
        $region21: #{tpu_custom_call.1} parent=11 // pred_check
          %p174 = pneg %p106
        $region22: #{tpu_custom_call.1} parent=11 // pred_check_branch
          %176 = sbr.rel (%p174) target = $region24
        $region23: #{tpu_custom_call.1} parent=11 // pred_region
          _
        $region24: #{tpu_custom_call.1} parent=11 // pred_fallthru
          _
        // Predicated region
        $region25: #{tpu_custom_call.1} parent=11 // pred_check
          %p177 = pneg %p127
        $region26: #{tpu_custom_call.1} parent=11 // pred_check_branch
          %179 = sbr.rel (%p177) target = $region28
        $region27: #{tpu_custom_call.1} parent=11 // pred_region
          _
        $region28: #{tpu_custom_call.1} parent=11 // pred_fallthru
          _
      $region12: #{tpu_custom_call.1} parent=5 // pred_fallthru
        _
      %p180 = scmp.lt.s32.totalorder %s17, 2
      // Predicated region
      $region29: #{tpu_custom_call.1} parent=5 // pred_check
        %p181 = pneg %p180
      $region30: #{tpu_custom_call.1} parent=5 // pred_check_branch
        %183 = sbr.rel (%p181) target = $region32
      $region31: #{tpu_custom_call.1} parent=5 // pred_region
        // Predicated region
        $region33: #{tpu_custom_call.1} parent=31 // pred_check
          %p184 = pneg %p37
        $region34: #{tpu_custom_call.1} parent=31 // pred_check_branch
          %186 = sbr.rel (%p184) target = $region36
        $region35: #{tpu_custom_call.1} parent=31 // pred_region
          %s187 = sand.u32 %s27, 1
          %s188 = scalar_lea.sflag [#allocation3], %s187
          %s189 = sand.u32 %s27, 1
          %s190 = smul.addr %s189, 512
          %s191 = scalar_lea.vmem [#allocation2], %s190
          %s192 = smul.u32 64, %s17
          %s194 = ssub.s32 8192, 8192
          %195 = vsyncadd %s188, %s194
          %s196 = smul.addr %s192, 128
          %s197 = scalar_lea.hbm %s0, %s196
          %s198 = sshll.u32 %s191, 4
          %s199 = int_to_ptr.vmem [resolvable:$true] %s198
          %204 = dma.hbm_to_vmem [thread:$0]  %s197, 8192, %s199, %s188, 128, 128, 8
        $region36: #{tpu_custom_call.1} parent=31 // pred_fallthru
          _
      $region32: #{tpu_custom_call.1} parent=5 // pred_fallthru
        _
      %p205 = scmp.le.s32.totalorder 1, %s17
      %p206 = scmp.lt.s32.totalorder %s17, 3
      %p207 = pnand %p205, %p206
      %p208 = pneg %p207
      // Predicated region
      $region37: #{tpu_custom_call.1} parent=5 // pred_check
        _
      $region38: #{tpu_custom_call.1} parent=5 // pred_check_branch
        %210 = sbr.rel (%p207) target = $region40
      $region39: #{tpu_custom_call.1} parent=5 // pred_region
        %s211 = ssub.s32 %s17, 1
        %s212 = sand.u32 %s30, 1
        %s213 = scalar_lea.sflag [#allocation3], %s212
        %s214 = sand.u32 %s30, 1
        %s215 = smul.addr %s214, 512
        %s216 = scalar_lea.vmem [#allocation2], %s215
        // Predicated region
        $region41: #{tpu_custom_call.1} parent=39 // pred_check
          %p217 = pneg %p43
        $region42: #{tpu_custom_call.1} parent=39 // pred_check_branch
          %219 = sbr.rel (%p217) target = $region44
        $region43: #{tpu_custom_call.1} parent=39 // pred_region
          %220 = dma.done %s213, 8192
        $region44: #{tpu_custom_call.1} parent=39 // pred_fallthru
          _
        %s221 = sand.u32 %s30, 1
        %s222 = scalar_lea.sflag [#allocation3], %s221
        %s223 = sand.u32 %s30, 1
        %s224 = smul.addr %s223, 512
        %s225 = scalar_lea.vmem [#allocation2], %s224
        %p226 = pneg %p43
        %p227 = pneg %p40
        %p228 = pneg %p64
        %p229 = pneg %p61
        %p230 = pneg %p85
        %p231 = pneg %p82
        %p232 = pneg %p106
        %p233 = pneg %p103
        %p234 = pneg %p127
        %p235 = pneg %p124
        %p236 = pneg %p153
        %p237 = pneg %p150
        %s238 = sand.u32 %s140, 1
        %s239 = scalar_lea.sflag [#allocation4], %s238
        %s240 = sand.u32 %s140, 1
        %s241 = smul.addr %s240, 512
        %s242 = scalar_lea.vmem [#allocation5], %s241
        %s243 = smul.u32 64, %s22
        %s244 = smul.u32 64, %s22
        %v246 = vld [vmem:[%s216] sm:$0xff]
        %v247 = vld [vmem:[%s216 + $0x8] sm:$0xff]
        %v248 = vld [vmem:[%s216 + $0x10] sm:$0xff]
        %v249 = vld [vmem:[%s216 + $0x18] sm:$0xff]
        %v250 = vld [vmem:[%s216 + $0x20] sm:$0xff]
        %v251 = vld [vmem:[%s216 + $0x28] sm:$0xff]
        %v252 = vld [vmem:[%s216 + $0x30] sm:$0xff]
        %v253 = vld [vmem:[%s216 + $0x38] sm:$0xff]
        %v254 = vld [vmem:[%s216 + $0x40] sm:$0xff]
        %v255 = vld [vmem:[%s216 + $0x48] sm:$0xff]
        %v256 = vld [vmem:[%s216 + $0x50] sm:$0xff]
        %v257 = vld [vmem:[%s216 + $0x58] sm:$0xff]
        %v258 = vld [vmem:[%s216 + $0x60] sm:$0xff]
        %v259 = vld [vmem:[%s216 + $0x68] sm:$0xff]
        %v260 = vld [vmem:[%s216 + $0x70] sm:$0xff]
        %v261 = vld [vmem:[%s216 + $0x78] sm:$0xff]
        %v262 = vld [vmem:[%s216 + $0x80] sm:$0xff]
        %v263 = vld [vmem:[%s216 + $0x88] sm:$0xff]
        %v264 = vld [vmem:[%s216 + $0x90] sm:$0xff]
        %v265 = vld [vmem:[%s216 + $0x98] sm:$0xff]
        %v266 = vld [vmem:[%s216 + $0xa0] sm:$0xff]
        %v267 = vld [vmem:[%s216 + $0xa8] sm:$0xff]
        %v268 = vld [vmem:[%s216 + $0xb0] sm:$0xff]
        %v269 = vld [vmem:[%s216 + $0xb8] sm:$0xff]
        %v270 = vld [vmem:[%s216 + $0xc0] sm:$0xff]
        %v271 = vld [vmem:[%s216 + $0xc8] sm:$0xff]
        %v272 = vld [vmem:[%s216 + $0xd0] sm:$0xff]
        %v273 = vld [vmem:[%s216 + $0xd8] sm:$0xff]
        %v274 = vld [vmem:[%s216 + $0xe0] sm:$0xff]
        %v275 = vld [vmem:[%s216 + $0xe8] sm:$0xff]
        %v276 = vld [vmem:[%s216 + $0xf0] sm:$0xff]
        %v277 = vld [vmem:[%s216 + $0xf8] sm:$0xff]
        %v278 = vld [vmem:[%s216 + $0x100] sm:$0xff]
        %v279 = vld [vmem:[%s216 + $0x108] sm:$0xff]
        %v280 = vld [vmem:[%s216 + $0x110] sm:$0xff]
        %v281 = vld [vmem:[%s216 + $0x118] sm:$0xff]
        %v282 = vld [vmem:[%s216 + $0x120] sm:$0xff]
        %v283 = vld [vmem:[%s216 + $0x128] sm:$0xff]
        %v284 = vld [vmem:[%s216 + $0x130] sm:$0xff]
        %v285 = vld [vmem:[%s216 + $0x138] sm:$0xff]
        %v286 = vld [vmem:[%s216 + $0x140] sm:$0xff]
        %v287 = vld [vmem:[%s216 + $0x148] sm:$0xff]
        %v288 = vld [vmem:[%s216 + $0x150] sm:$0xff]
        %v289 = vld [vmem:[%s216 + $0x158] sm:$0xff]
        %v290 = vld [vmem:[%s216 + $0x160] sm:$0xff]
        %v291 = vld [vmem:[%s216 + $0x168] sm:$0xff]
        %v292 = vld [vmem:[%s216 + $0x170] sm:$0xff]
        %v293 = vld [vmem:[%s216 + $0x178] sm:$0xff]
        %v294 = vld [vmem:[%s216 + $0x180] sm:$0xff]
        %v295 = vld [vmem:[%s216 + $0x188] sm:$0xff]
        %v296 = vld [vmem:[%s216 + $0x190] sm:$0xff]
        %v297 = vld [vmem:[%s216 + $0x198] sm:$0xff]
        %v298 = vld [vmem:[%s216 + $0x1a0] sm:$0xff]
        %v299 = vld [vmem:[%s216 + $0x1a8] sm:$0xff]
        %v300 = vld [vmem:[%s216 + $0x1b0] sm:$0xff]
        %v301 = vld [vmem:[%s216 + $0x1b8] sm:$0xff]
        %v302 = vld [vmem:[%s216 + $0x1c0] sm:$0xff]
        %v303 = vld [vmem:[%s216 + $0x1c8] sm:$0xff]
        %v304 = vld [vmem:[%s216 + $0x1d0] sm:$0xff]
        %v305 = vld [vmem:[%s216 + $0x1d8] sm:$0xff]
        %v306 = vld [vmem:[%s216 + $0x1e0] sm:$0xff]
        %v307 = vld [vmem:[%s216 + $0x1e8] sm:$0xff]
        %v308 = vld [vmem:[%s216 + $0x1f0] sm:$0xff]
        %v309 = vld [vmem:[%s216 + $0x1f8] sm:$0xff]
        %v310 = vpack.c.bf16 %v247, %v246
        %v311 = vpack.c.bf16 %v249, %v248
        %v312 = vpack.c.bf16 %v251, %v250
        %v313 = vpack.c.bf16 %v253, %v252
        %v314 = vpack.c.bf16 %v255, %v254
        %v315 = vpack.c.bf16 %v257, %v256
        %v316 = vpack.c.bf16 %v259, %v258
        %v317 = vpack.c.bf16 %v261, %v260
        %v318 = vpack.c.bf16 %v263, %v262
        %v319 = vpack.c.bf16 %v265, %v264
        %v320 = vpack.c.bf16 %v267, %v266
        %v321 = vpack.c.bf16 %v269, %v268
        %v322 = vpack.c.bf16 %v271, %v270
        %v323 = vpack.c.bf16 %v273, %v272
        %v324 = vpack.c.bf16 %v275, %v274
        %v325 = vpack.c.bf16 %v277, %v276
        %v326 = vpack.c.bf16 %v279, %v278
        %v327 = vpack.c.bf16 %v281, %v280
        %v328 = vpack.c.bf16 %v283, %v282
        %v329 = vpack.c.bf16 %v285, %v284
        %v330 = vpack.c.bf16 %v287, %v286
        %v331 = vpack.c.bf16 %v289, %v288
        %v332 = vpack.c.bf16 %v291, %v290
        %v333 = vpack.c.bf16 %v293, %v292
        %v334 = vpack.c.bf16 %v295, %v294
        %v335 = vpack.c.bf16 %v297, %v296
        %v336 = vpack.c.bf16 %v299, %v298
        %v337 = vpack.c.bf16 %v301, %v300
        %v338 = vpack.c.bf16 %v303, %v302
        %v339 = vpack.c.bf16 %v305, %v304
        %v340 = vpack.c.bf16 %v307, %v306
        %v341 = vpack.c.bf16 %v309, %v308
        %v342 = vld [vmem:[%s1] sm:$0xf]
        %v343 = vld [vmem:[%s1 + $0x4] sm:$0xf]
        %v344 = vld [vmem:[%s1 + $0x8] sm:$0xf]
        %v345 = vld [vmem:[%s1 + $0xc] sm:$0xf]
        %v346 = vld [vmem:[%s1 + $0x10] sm:$0xf]
        %v347 = vld [vmem:[%s1 + $0x14] sm:$0xf]
        %v348 = vld [vmem:[%s1 + $0x18] sm:$0xf]
        %v349 = vld [vmem:[%s1 + $0x1c] sm:$0xf]
        %v350 = vld [vmem:[%s1 + $0x20] sm:$0xf]
        %v351 = vld [vmem:[%s1 + $0x24] sm:$0xf]
        %v352 = vld [vmem:[%s1 + $0x28] sm:$0xf]
        %v353 = vld [vmem:[%s1 + $0x2c] sm:$0xf]
        %v354 = vld [vmem:[%s1 + $0x30] sm:$0xf]
        %v355 = vld [vmem:[%s1 + $0x34] sm:$0xf]
        %v356 = vld [vmem:[%s1 + $0x38] sm:$0xf]
        %v357 = vld [vmem:[%s1 + $0x3c] sm:$0xf]
        %v358 = vld [vmem:[%s2] sm:$0x1]
        %v360 = vlaneseq
        %v361 = vshrl.u32 %v360, 7
        %v362 = vsub.s32 0, %v361
        %v363 = vrot.slane %v358, %v362
        %v381 = vunpack.c.l.b16 %v342
        %v382 = vunpack.c.l.b16 %v343
        %v383 = vunpack.c.l.b16 %v344
        %v384 = vunpack.c.l.b16 %v345
        %v385 = vunpack.c.l.b16 %v346
        %v386 = vunpack.c.l.b16 %v347
        %v387 = vunpack.c.l.b16 %v348
        %v388 = vunpack.c.l.b16 %v349
        %v389 = vunpack.c.l.b16 %v350
        %v390 = vunpack.c.l.b16 %v351
        %v391 = vunpack.c.l.b16 %v352
        %v392 = vunpack.c.l.b16 %v353
        %v393 = vunpack.c.l.b16 %v354
        %v394 = vunpack.c.l.b16 %v355
        %v395 = vunpack.c.l.b16 %v356
        %v396 = vunpack.c.l.b16 %v357
        %v397 = vpack.c.b16 %v382, %v381
        %v398 = vpack.c.b16 %v384, %v383
        %v399 = vpack.c.b16 %v386, %v385
        %v400 = vpack.c.b16 %v388, %v387
        %v401 = vpack.c.b16 %v390, %v389
        %v402 = vpack.c.b16 %v392, %v391
        %v403 = vpack.c.b16 %v394, %v393
        %v404 = vpack.c.b16 %v396, %v395
        %413 = vmatprep.subr.bf16.mxu0 0
        %414 = vmatpush1.bf16.msra.mxu0 %v404
        %415 = vmatprep.subr.bf16.mxu0 0
        %416 = vmatpush1.bf16.msra.mxu0 %v403
        %417 = vmatprep.subr.bf16.mxu0 0
        %418 = vmatpush1.bf16.msra.mxu0 %v402
        %419 = vmatprep.subr.bf16.mxu0 0
        %420 = vmatpush1.bf16.msra.mxu0 %v401
        %421 = vmatprep.subr.bf16.mxu0 0
        %422 = vmatpush1.bf16.msra.mxu0 %v400
        %423 = vmatprep.subr.bf16.mxu0 0
        %424 = vmatpush1.bf16.msra.mxu0 %v399
        %425 = vmatprep.subr.bf16.mxu0 0
        %426 = vmatpush1.bf16.msra.mxu0 %v398
        %427 = vmatprep.subr.bf16.mxu0 0
        %428 = vmatpush1.bf16.msra.mxu0 %v397
        %429 = vmatprep.subr.bf16.mxu0 0
        %430 = vmatpush2.bf16.msra.mxu0 0
        %431 = vmatprep.subr.bf16.mxu0 0
        %432 = vmatpush2.bf16.msra.mxu0 0
        %433 = vmatprep.subr.bf16.mxu0 0
        %434 = vmatpush2.bf16.msra.mxu0 0
        %435 = vmatprep.subr.bf16.mxu0 0
        %436 = vmatpush2.bf16.msra.mxu0 0
        %437 = vmatprep.subr.bf16.mxu0 0
        %438 = vmatpush2.bf16.msra.mxu0 0
        %439 = vmatprep.subr.bf16.mxu0 0
        %440 = vmatpush2.bf16.msra.mxu0 0
        %441 = vmatprep.subr.bf16.mxu0 0
        %442 = vmatpush2.bf16.msra.mxu0 0
        %443 = vmatprep.subr.bf16.mxu0 0
        %444 = vmatpush2.bf16.msra.mxu0 0
        %445 = vmatprep.mubr.bf16.mxu0 0
        %446 = vmatmul.mubr.bf16.gmra.mxu0 %v310
        %v447 = vpop.f32.mrf.mxu0
        %v448 = vadd.f32 %v363, %v447
        %v449 = vpop.f32.mrf.mxu0
        %v450 = vpop.f32.mrf.mxu0
        %v451 = vadd.f32 %v363, %v450
        %v452 = vpop.f32.mrf.mxu0
        %453 = vmatprep.mubr.bf16.mxu0 0
        %454 = vmatmul.mubr.bf16.gmra.mxu0 %v311
        %v455 = vpop.f32.mrf.mxu0
        %v456 = vadd.f32 %v363, %v455
        %v457 = vpop.f32.mrf.mxu0
        %v458 = vpop.f32.mrf.mxu0
        %v459 = vadd.f32 %v363, %v458
        %v460 = vpop.f32.mrf.mxu0
        %461 = vmatprep.mubr.bf16.mxu0 0
        %462 = vmatmul.mubr.bf16.gmra.mxu0 %v312
        %v463 = vpop.f32.mrf.mxu0
        %v464 = vadd.f32 %v363, %v463
        %v465 = vpop.f32.mrf.mxu0
        %v466 = vpop.f32.mrf.mxu0
        %v467 = vadd.f32 %v363, %v466
        %v468 = vpop.f32.mrf.mxu0
        %469 = vmatprep.mubr.bf16.mxu0 0
        %470 = vmatmul.mubr.bf16.gmra.mxu0 %v313
        %v471 = vpop.f32.mrf.mxu0
        %v472 = vadd.f32 %v363, %v471
        %v473 = vpop.f32.mrf.mxu0
        %v474 = vpop.f32.mrf.mxu0
        %v475 = vadd.f32 %v363, %v474
        %v476 = vpop.f32.mrf.mxu0
        %477 = vmatprep.mubr.bf16.mxu0 0
        %478 = vmatmul.mubr.bf16.gmra.mxu0 %v314
        %v479 = vpop.f32.mrf.mxu0
        %v480 = vadd.f32 %v363, %v479
        %v481 = vpop.f32.mrf.mxu0
        %v482 = vpop.f32.mrf.mxu0
        %v483 = vadd.f32 %v363, %v482
        %v484 = vpop.f32.mrf.mxu0
        %485 = vmatprep.mubr.bf16.mxu0 0
        %486 = vmatmul.mubr.bf16.gmra.mxu0 %v315
        %v487 = vpop.f32.mrf.mxu0
        %v488 = vadd.f32 %v363, %v487
        %v489 = vpop.f32.mrf.mxu0
        %v490 = vpop.f32.mrf.mxu0
        %v491 = vadd.f32 %v363, %v490
        %v492 = vpop.f32.mrf.mxu0
        %493 = vmatprep.mubr.bf16.mxu0 0
        %494 = vmatmul.mubr.bf16.gmra.mxu0 %v316
        %v495 = vpop.f32.mrf.mxu0
        %v496 = vadd.f32 %v363, %v495
        %v497 = vpop.f32.mrf.mxu0
        %v498 = vpop.f32.mrf.mxu0
        %v499 = vadd.f32 %v363, %v498
        %v500 = vpop.f32.mrf.mxu0
        %501 = vmatprep.mubr.bf16.mxu0 0
        %502 = vmatmul.mubr.bf16.gmra.mxu0 %v317
        %v503 = vpop.f32.mrf.mxu0
        %v504 = vadd.f32 %v363, %v503
        %v505 = vpop.f32.mrf.mxu0
        %v506 = vpop.f32.mrf.mxu0
        %v507 = vadd.f32 %v363, %v506
        %v508 = vpop.f32.mrf.mxu0
        %509 = vmatprep.mubr.bf16.mxu0 0
        %510 = vmatmul.mubr.bf16.gmra.mxu0 %v318
        %v511 = vpop.f32.mrf.mxu0
        %v512 = vadd.f32 %v363, %v511
        %v513 = vpop.f32.mrf.mxu0
        %v514 = vpop.f32.mrf.mxu0
        %v515 = vadd.f32 %v363, %v514
        %v516 = vpop.f32.mrf.mxu0
        %517 = vmatprep.mubr.bf16.mxu0 0
        %518 = vmatmul.mubr.bf16.gmra.mxu0 %v319
        %v519 = vpop.f32.mrf.mxu0
        %v520 = vadd.f32 %v363, %v519
        %v521 = vpop.f32.mrf.mxu0
        %v522 = vpop.f32.mrf.mxu0
        %v523 = vadd.f32 %v363, %v522
        %v524 = vpop.f32.mrf.mxu0
        %525 = vmatprep.mubr.bf16.mxu0 0
        %526 = vmatmul.mubr.bf16.gmra.mxu0 %v320
        %v527 = vpop.f32.mrf.mxu0
        %v528 = vadd.f32 %v363, %v527
        %v529 = vpop.f32.mrf.mxu0
        %v530 = vpop.f32.mrf.mxu0
        %v531 = vadd.f32 %v363, %v530
        %v532 = vpop.f32.mrf.mxu0
        %533 = vmatprep.mubr.bf16.mxu0 0
        %534 = vmatmul.mubr.bf16.gmra.mxu0 %v321
        %v535 = vpop.f32.mrf.mxu0
        %v536 = vadd.f32 %v363, %v535
        %v537 = vpop.f32.mrf.mxu0
        %v538 = vpop.f32.mrf.mxu0
        %v539 = vadd.f32 %v363, %v538
        %v540 = vpop.f32.mrf.mxu0
        %541 = vmatprep.mubr.bf16.mxu0 0
        %542 = vmatmul.mubr.bf16.gmra.mxu0 %v322
        %v543 = vpop.f32.mrf.mxu0
        %v544 = vadd.f32 %v363, %v543
        %v545 = vpop.f32.mrf.mxu0
        %v546 = vpop.f32.mrf.mxu0
        %v547 = vadd.f32 %v363, %v546
        %v548 = vpop.f32.mrf.mxu0
        %549 = vmatprep.mubr.bf16.mxu0 0
        %550 = vmatmul.mubr.bf16.gmra.mxu0 %v323
        %v551 = vpop.f32.mrf.mxu0
        %v552 = vadd.f32 %v363, %v551
        %v553 = vpop.f32.mrf.mxu0
        %v554 = vpop.f32.mrf.mxu0
        %v555 = vadd.f32 %v363, %v554
        %v556 = vpop.f32.mrf.mxu0
        %557 = vmatprep.mubr.bf16.mxu0 0
        %558 = vmatmul.mubr.bf16.gmra.mxu0 %v324
        %v559 = vpop.f32.mrf.mxu0
        %v560 = vadd.f32 %v363, %v559
        %v561 = vpop.f32.mrf.mxu0
        %v562 = vpop.f32.mrf.mxu0
        %v563 = vadd.f32 %v363, %v562
        %v564 = vpop.f32.mrf.mxu0
        %565 = vmatprep.mubr.bf16.mxu0 0
        %566 = vmatmul.mubr.bf16.gmra.mxu0 %v325
        %v567 = vpop.f32.mrf.mxu0
        %v568 = vadd.f32 %v363, %v567
        %v569 = vpop.f32.mrf.mxu0
        %v570 = vpop.f32.mrf.mxu0
        %v571 = vadd.f32 %v363, %v570
        %v572 = vpop.f32.mrf.mxu0
        %573 = vmatprep.mubr.bf16.mxu0 0
        %574 = vmatmul.mubr.bf16.gmra.mxu0 %v326
        %v575 = vpop.f32.mrf.mxu0
        %v576 = vadd.f32 %v363, %v575
        %v577 = vpop.f32.mrf.mxu0
        %v578 = vpop.f32.mrf.mxu0
        %v579 = vadd.f32 %v363, %v578
        %v580 = vpop.f32.mrf.mxu0
        %581 = vmatprep.mubr.bf16.mxu0 0
        %582 = vmatmul.mubr.bf16.gmra.mxu0 %v327
        %v583 = vpop.f32.mrf.mxu0
        %v584 = vadd.f32 %v363, %v583
        %v585 = vpop.f32.mrf.mxu0
        %v586 = vpop.f32.mrf.mxu0
        %v587 = vadd.f32 %v363, %v586
        %v588 = vpop.f32.mrf.mxu0
        %589 = vmatprep.mubr.bf16.mxu0 0
        %590 = vmatmul.mubr.bf16.gmra.mxu0 %v328
        %v591 = vpop.f32.mrf.mxu0
        %v592 = vadd.f32 %v363, %v591
        %v593 = vpop.f32.mrf.mxu0
        %v594 = vpop.f32.mrf.mxu0
        %v595 = vadd.f32 %v363, %v594
        %v596 = vpop.f32.mrf.mxu0
        %597 = vmatprep.mubr.bf16.mxu0 0
        %598 = vmatmul.mubr.bf16.gmra.mxu0 %v329
        %v599 = vpop.f32.mrf.mxu0
        %v600 = vadd.f32 %v363, %v599
        %v601 = vpop.f32.mrf.mxu0
        %v602 = vpop.f32.mrf.mxu0
        %v603 = vadd.f32 %v363, %v602
        %v604 = vpop.f32.mrf.mxu0
        %605 = vmatprep.mubr.bf16.mxu0 0
        %606 = vmatmul.mubr.bf16.gmra.mxu0 %v330
        %v607 = vpop.f32.mrf.mxu0
        %v608 = vadd.f32 %v363, %v607
        %v609 = vpop.f32.mrf.mxu0
        %v610 = vpop.f32.mrf.mxu0
        %v611 = vadd.f32 %v363, %v610
        %v612 = vpop.f32.mrf.mxu0
        %613 = vmatprep.mubr.bf16.mxu0 0
        %614 = vmatmul.mubr.bf16.gmra.mxu0 %v331
        %v615 = vpop.f32.mrf.mxu0
        %v616 = vadd.f32 %v363, %v615
        %v617 = vpop.f32.mrf.mxu0
        %v618 = vpop.f32.mrf.mxu0
        %v619 = vadd.f32 %v363, %v618
        %v620 = vpop.f32.mrf.mxu0
        %621 = vmatprep.mubr.bf16.mxu0 0
        %622 = vmatmul.mubr.bf16.gmra.mxu0 %v332
        %v623 = vpop.f32.mrf.mxu0
        %v624 = vadd.f32 %v363, %v623
        %v625 = vpop.f32.mrf.mxu0
        %v626 = vpop.f32.mrf.mxu0
        %v627 = vadd.f32 %v363, %v626
        %v628 = vpop.f32.mrf.mxu0
        %629 = vmatprep.mubr.bf16.mxu0 0
        %630 = vmatmul.mubr.bf16.gmra.mxu0 %v333
        %v631 = vpop.f32.mrf.mxu0
        %v632 = vadd.f32 %v363, %v631
        %v633 = vpop.f32.mrf.mxu0
        %v634 = vpop.f32.mrf.mxu0
        %v635 = vadd.f32 %v363, %v634
        %v636 = vpop.f32.mrf.mxu0
        %637 = vmatprep.mubr.bf16.mxu0 0
        %638 = vmatmul.mubr.bf16.gmra.mxu0 %v334
        %v639 = vpop.f32.mrf.mxu0
        %v640 = vadd.f32 %v363, %v639
        %v641 = vpop.f32.mrf.mxu0
        %v642 = vpop.f32.mrf.mxu0
        %v643 = vadd.f32 %v363, %v642
        %v644 = vpop.f32.mrf.mxu0
        %645 = vmatprep.mubr.bf16.mxu0 0
        %646 = vmatmul.mubr.bf16.gmra.mxu0 %v335
        %v647 = vpop.f32.mrf.mxu0
        %v648 = vadd.f32 %v363, %v647
        %v649 = vpop.f32.mrf.mxu0
        %v650 = vpop.f32.mrf.mxu0
        %v651 = vadd.f32 %v363, %v650
        %v652 = vpop.f32.mrf.mxu0
        %653 = vmatprep.mubr.bf16.mxu0 0
        %654 = vmatmul.mubr.bf16.gmra.mxu0 %v336
        %v655 = vpop.f32.mrf.mxu0
        %v656 = vadd.f32 %v363, %v655
        %v657 = vpop.f32.mrf.mxu0
        %v658 = vpop.f32.mrf.mxu0
        %v659 = vadd.f32 %v363, %v658
        %v660 = vpop.f32.mrf.mxu0
        %661 = vmatprep.mubr.bf16.mxu0 0
        %662 = vmatmul.mubr.bf16.gmra.mxu0 %v337
        %v663 = vpop.f32.mrf.mxu0
        %v664 = vadd.f32 %v363, %v663
        %v665 = vpop.f32.mrf.mxu0
        %v666 = vpop.f32.mrf.mxu0
        %v667 = vadd.f32 %v363, %v666
        %v668 = vpop.f32.mrf.mxu0
        %669 = vmatprep.mubr.bf16.mxu0 0
        %670 = vmatmul.mubr.bf16.gmra.mxu0 %v338
        %v671 = vpop.f32.mrf.mxu0
        %v672 = vadd.f32 %v363, %v671
        %v673 = vpop.f32.mrf.mxu0
        %v674 = vpop.f32.mrf.mxu0
        %v675 = vadd.f32 %v363, %v674
        %v676 = vpop.f32.mrf.mxu0
        %677 = vmatprep.mubr.bf16.mxu0 0
        %678 = vmatmul.mubr.bf16.gmra.mxu0 %v339
        %v679 = vpop.f32.mrf.mxu0
        %v680 = vadd.f32 %v363, %v679
        %v681 = vpop.f32.mrf.mxu0
        %v682 = vpop.f32.mrf.mxu0
        %v683 = vadd.f32 %v363, %v682
        %v684 = vpop.f32.mrf.mxu0
        %685 = vmatprep.mubr.bf16.mxu0 0
        %686 = vmatmul.mubr.bf16.gmra.mxu0 %v340
        %v687 = vpop.f32.mrf.mxu0
        %v688 = vadd.f32 %v363, %v687
        %v689 = vpop.f32.mrf.mxu0
        %v690 = vpop.f32.mrf.mxu0
        %v691 = vadd.f32 %v363, %v690
        %v692 = vpop.f32.mrf.mxu0
        %693 = vmatprep.mubr.bf16.mxu0 0
        %694 = vmatmul.mubr.bf16.gmra.mxu0 %v341
        %v695 = vpop.f32.mrf.mxu0
        %v696 = vadd.f32 %v363, %v695
        %v697 = vpop.f32.mrf.mxu0
        %v698 = vpop.f32.mrf.mxu0
        %v699 = vadd.f32 %v363, %v698
        %v700 = vpop.f32.mrf.mxu0
        %701 = vdwg.mxu0
        %v702 = vmax.f32 %v448, 0.0
        %v703 = vmax.f32 %v451, 0.0
        %v704 = vmax.f32 %v456, 0.0
        %v705 = vmax.f32 %v459, 0.0
        %v706 = vmax.f32 %v464, 0.0
        %v707 = vmax.f32 %v467, 0.0
        %v708 = vmax.f32 %v472, 0.0
        %v709 = vmax.f32 %v475, 0.0
        %v710 = vmax.f32 %v480, 0.0
        %v711 = vmax.f32 %v483, 0.0
        %v712 = vmax.f32 %v488, 0.0
        %v713 = vmax.f32 %v491, 0.0
        %v714 = vmax.f32 %v496, 0.0
        %v715 = vmax.f32 %v499, 0.0
        %v716 = vmax.f32 %v504, 0.0
        %v717 = vmax.f32 %v507, 0.0
        %v718 = vmax.f32 %v512, 0.0
        %v719 = vmax.f32 %v515, 0.0
        %v720 = vmax.f32 %v520, 0.0
        %v721 = vmax.f32 %v523, 0.0
        %v722 = vmax.f32 %v528, 0.0
        %v723 = vmax.f32 %v531, 0.0
        %v724 = vmax.f32 %v536, 0.0
        %v725 = vmax.f32 %v539, 0.0
        %v726 = vmax.f32 %v544, 0.0
        %v727 = vmax.f32 %v547, 0.0
        %v728 = vmax.f32 %v552, 0.0
        %v729 = vmax.f32 %v555, 0.0
        %v730 = vmax.f32 %v560, 0.0
        %v731 = vmax.f32 %v563, 0.0
        %v732 = vmax.f32 %v568, 0.0
        %v733 = vmax.f32 %v571, 0.0
        %v734 = vmax.f32 %v576, 0.0
        %v735 = vmax.f32 %v579, 0.0
        %v736 = vmax.f32 %v584, 0.0
        %v737 = vmax.f32 %v587, 0.0
        %v738 = vmax.f32 %v592, 0.0
        %v739 = vmax.f32 %v595, 0.0
        %v740 = vmax.f32 %v600, 0.0
        %v741 = vmax.f32 %v603, 0.0
        %v742 = vmax.f32 %v608, 0.0
        %v743 = vmax.f32 %v611, 0.0
        %v744 = vmax.f32 %v616, 0.0
        %v745 = vmax.f32 %v619, 0.0
        %v746 = vmax.f32 %v624, 0.0
        %v747 = vmax.f32 %v627, 0.0
        %v748 = vmax.f32 %v632, 0.0
        %v749 = vmax.f32 %v635, 0.0
        %v750 = vmax.f32 %v640, 0.0
        %v751 = vmax.f32 %v643, 0.0
        %v752 = vmax.f32 %v648, 0.0
        %v753 = vmax.f32 %v651, 0.0
        %v754 = vmax.f32 %v656, 0.0
        %v755 = vmax.f32 %v659, 0.0
        %v756 = vmax.f32 %v664, 0.0
        %v757 = vmax.f32 %v667, 0.0
        %v758 = vmax.f32 %v672, 0.0
        %v759 = vmax.f32 %v675, 0.0
        %v760 = vmax.f32 %v680, 0.0
        %v761 = vmax.f32 %v683, 0.0
        %v762 = vmax.f32 %v688, 0.0
        %v763 = vmax.f32 %v691, 0.0
        %v764 = vmax.f32 %v696, 0.0
        %v765 = vmax.f32 %v699, 0.0
        %v766 = vpack.c.bf16 %v703, %v702
        %v767 = vpack.c.bf16 %v705, %v704
        %v768 = vpack.c.bf16 %v707, %v706
        %v769 = vpack.c.bf16 %v709, %v708
        %v770 = vpack.c.bf16 %v711, %v710
        %v771 = vpack.c.bf16 %v713, %v712
        %v772 = vpack.c.bf16 %v715, %v714
        %v773 = vpack.c.bf16 %v717, %v716
        %v774 = vpack.c.bf16 %v719, %v718
        %v775 = vpack.c.bf16 %v721, %v720
        %v776 = vpack.c.bf16 %v723, %v722
        %v777 = vpack.c.bf16 %v725, %v724
        %v778 = vpack.c.bf16 %v727, %v726
        %v779 = vpack.c.bf16 %v729, %v728
        %v780 = vpack.c.bf16 %v731, %v730
        %v781 = vpack.c.bf16 %v733, %v732
        %v782 = vpack.c.bf16 %v735, %v734
        %v783 = vpack.c.bf16 %v737, %v736
        %v784 = vpack.c.bf16 %v739, %v738
        %v785 = vpack.c.bf16 %v741, %v740
        %v786 = vpack.c.bf16 %v743, %v742
        %v787 = vpack.c.bf16 %v745, %v744
        %v788 = vpack.c.bf16 %v747, %v746
        %v789 = vpack.c.bf16 %v749, %v748
        %v790 = vpack.c.bf16 %v751, %v750
        %v791 = vpack.c.bf16 %v753, %v752
        %v792 = vpack.c.bf16 %v755, %v754
        %v793 = vpack.c.bf16 %v757, %v756
        %v794 = vpack.c.bf16 %v759, %v758
        %v795 = vpack.c.bf16 %v761, %v760
        %v796 = vpack.c.bf16 %v763, %v762
        %v797 = vpack.c.bf16 %v765, %v764
        %v798 = vld [vmem:[%s3] sm:$0xf]
        %v799 = vld [vmem:[%s3 + $0x4] sm:$0xf]
        %v800 = vld [vmem:[%s3 + $0x8] sm:$0xf]
        %v801 = vld [vmem:[%s3 + $0xc] sm:$0xf]
        %v802 = vld [vmem:[%s4] sm:$0x1]
        %v804 = vlaneseq
        %v805 = vshrl.u32 %v804, 7
        %v806 = vsub.s32 0, %v805
        %v807 = vrot.slane %v802, %v806
        %v813 = vunpack.c.l.b16 %v798
        %v814 = vunpack.c.l.b16 %v799
        %v815 = vunpack.c.l.b16 %v800
        %v816 = vunpack.c.l.b16 %v801
        %v817 = vpack.c.b16 %v814, %v813
        %v818 = vpack.c.b16 %v816, %v815
        %vm821 = vcmask 261120
        %v823 = vsel %vm821, %v766, 0
        %v826 = vsel %vm821, %v767, 0
        %v829 = vsel %vm821, %v768, 0
        %v832 = vsel %vm821, %v769, 0
        %v835 = vsel %vm821, %v770, 0
        %v838 = vsel %vm821, %v771, 0
        %v841 = vsel %vm821, %v772, 0
        %v844 = vsel %vm821, %v773, 0
        %v847 = vsel %vm821, %v774, 0
        %v850 = vsel %vm821, %v775, 0
        %v853 = vsel %vm821, %v776, 0
        %v856 = vsel %vm821, %v777, 0
        %v859 = vsel %vm821, %v778, 0
        %v862 = vsel %vm821, %v779, 0
        %v865 = vsel %vm821, %v780, 0
        %v868 = vsel %vm821, %v781, 0
        %v871 = vsel %vm821, %v782, 0
        %v874 = vsel %vm821, %v783, 0
        %v877 = vsel %vm821, %v784, 0
        %v880 = vsel %vm821, %v785, 0
        %v883 = vsel %vm821, %v786, 0
        %v886 = vsel %vm821, %v787, 0
        %v889 = vsel %vm821, %v788, 0
        %v892 = vsel %vm821, %v789, 0
        %v895 = vsel %vm821, %v790, 0
        %v898 = vsel %vm821, %v791, 0
        %v901 = vsel %vm821, %v792, 0
        %v904 = vsel %vm821, %v793, 0
        %v907 = vsel %vm821, %v794, 0
        %v910 = vsel %vm821, %v795, 0
        %v913 = vsel %vm821, %v796, 0
        %v916 = vsel %vm821, %v797, 0
        %918 = vmatprep.subr.bf16.mxu0 0
        %919 = vmatpush1.bf16.msra.mxu0 0
        %920 = vmatprep.subr.bf16.mxu0 0
        %921 = vmatpush1.bf16.msra.mxu0 0
        %922 = vmatprep.subr.bf16.mxu0 0
        %923 = vmatpush1.bf16.msra.mxu0 0
        %924 = vmatprep.subr.bf16.mxu0 0
        %925 = vmatpush1.bf16.msra.mxu0 0
        %926 = vmatprep.subr.bf16.mxu0 0
        %927 = vmatpush1.bf16.msra.mxu0 0
        %928 = vmatprep.subr.bf16.mxu0 0
        %929 = vmatpush1.bf16.msra.mxu0 0
        %930 = vmatprep.subr.bf16.mxu0 0
        %931 = vmatpush1.bf16.msra.mxu0 %v818
        %932 = vmatprep.subr.bf16.mxu0 0
        %933 = vmatpush1.bf16.msra.mxu0 %v817
        %934 = vmatprep.subr.bf16.mxu0 0
        %935 = vmatpush2.bf16.msra.mxu0 0
        %936 = vmatprep.subr.bf16.mxu0 0
        %937 = vmatpush2.bf16.msra.mxu0 0
        %938 = vmatprep.subr.bf16.mxu0 0
        %939 = vmatpush2.bf16.msra.mxu0 0
        %940 = vmatprep.subr.bf16.mxu0 0
        %941 = vmatpush2.bf16.msra.mxu0 0
        %942 = vmatprep.subr.bf16.mxu0 0
        %943 = vmatpush2.bf16.msra.mxu0 0
        %944 = vmatprep.subr.bf16.mxu0 0
        %945 = vmatpush2.bf16.msra.mxu0 0
        %946 = vmatprep.subr.bf16.mxu0 0
        %947 = vmatpush2.bf16.msra.mxu0 0
        %948 = vmatprep.subr.bf16.mxu0 0
        %949 = vmatpush2.bf16.msra.mxu0 0
        %950 = vmatprep.mubr.bf16.mxu0 0
        %951 = vmatmul.mubr.bf16.gmra.mxu0 %v823
        %v952 = vpop.f32.mrf.mxu0
        %v953 = vadd.f32 %v807, %v952
        %v954 = vpop.f32.mrf.mxu0
        %v955 = vpop.f32.mrf.mxu0
        %v956 = vadd.f32 %v807, %v955
        %v957 = vpop.f32.mrf.mxu0
        %958 = vmatprep.mubr.bf16.mxu0 0
        %959 = vmatmul.mubr.bf16.gmra.mxu0 %v826
        %v960 = vpop.f32.mrf.mxu0
        %v961 = vadd.f32 %v807, %v960
        %v962 = vpop.f32.mrf.mxu0
        %v963 = vpop.f32.mrf.mxu0
        %v964 = vadd.f32 %v807, %v963
        %v965 = vpop.f32.mrf.mxu0
        %966 = vmatprep.mubr.bf16.mxu0 0
        %967 = vmatmul.mubr.bf16.gmra.mxu0 %v829
        %v968 = vpop.f32.mrf.mxu0
        %v969 = vadd.f32 %v807, %v968
        %v970 = vpop.f32.mrf.mxu0
        %v971 = vpop.f32.mrf.mxu0
        %v972 = vadd.f32 %v807, %v971
        %v973 = vpop.f32.mrf.mxu0
        %974 = vmatprep.mubr.bf16.mxu0 0
        %975 = vmatmul.mubr.bf16.gmra.mxu0 %v832
        %v976 = vpop.f32.mrf.mxu0
        %v977 = vadd.f32 %v807, %v976
        %v978 = vpop.f32.mrf.mxu0
        %v979 = vpop.f32.mrf.mxu0
        %v980 = vadd.f32 %v807, %v979
        %v981 = vpop.f32.mrf.mxu0
        %982 = vmatprep.mubr.bf16.mxu0 0
        %983 = vmatmul.mubr.bf16.gmra.mxu0 %v835
        %v984 = vpop.f32.mrf.mxu0
        %v985 = vadd.f32 %v807, %v984
        %v986 = vpop.f32.mrf.mxu0
        %v987 = vpop.f32.mrf.mxu0
        %v988 = vadd.f32 %v807, %v987
        %v989 = vpop.f32.mrf.mxu0
        %990 = vmatprep.mubr.bf16.mxu0 0
        %991 = vmatmul.mubr.bf16.gmra.mxu0 %v838
        %v992 = vpop.f32.mrf.mxu0
        %v993 = vadd.f32 %v807, %v992
        %v994 = vpop.f32.mrf.mxu0
        %v995 = vpop.f32.mrf.mxu0
        %v996 = vadd.f32 %v807, %v995
        %v997 = vpop.f32.mrf.mxu0
        %998 = vmatprep.mubr.bf16.mxu0 0
        %999 = vmatmul.mubr.bf16.gmra.mxu0 %v841
        %v1000 = vpop.f32.mrf.mxu0
        %v1001 = vadd.f32 %v807, %v1000
        %v1002 = vpop.f32.mrf.mxu0
        %v1003 = vpop.f32.mrf.mxu0
        %v1004 = vadd.f32 %v807, %v1003
        %v1005 = vpop.f32.mrf.mxu0
        %1006 = vmatprep.mubr.bf16.mxu0 0
        %1007 = vmatmul.mubr.bf16.gmra.mxu0 %v844
        %v1008 = vpop.f32.mrf.mxu0
        %v1009 = vadd.f32 %v807, %v1008
        %v1010 = vpop.f32.mrf.mxu0
        %v1011 = vpop.f32.mrf.mxu0
        %v1012 = vadd.f32 %v807, %v1011
        %v1013 = vpop.f32.mrf.mxu0
        %1014 = vmatprep.mubr.bf16.mxu0 0
        %1015 = vmatmul.mubr.bf16.gmra.mxu0 %v847
        %v1016 = vpop.f32.mrf.mxu0
        %v1017 = vadd.f32 %v807, %v1016
        %v1018 = vpop.f32.mrf.mxu0
        %v1019 = vpop.f32.mrf.mxu0
        %v1020 = vadd.f32 %v807, %v1019
        %v1021 = vpop.f32.mrf.mxu0
        %1022 = vmatprep.mubr.bf16.mxu0 0
        %1023 = vmatmul.mubr.bf16.gmra.mxu0 %v850
        %v1024 = vpop.f32.mrf.mxu0
        %v1025 = vadd.f32 %v807, %v1024
        %v1026 = vpop.f32.mrf.mxu0
        %v1027 = vpop.f32.mrf.mxu0
        %v1028 = vadd.f32 %v807, %v1027
        %v1029 = vpop.f32.mrf.mxu0
        %1030 = vmatprep.mubr.bf16.mxu0 0
        %1031 = vmatmul.mubr.bf16.gmra.mxu0 %v853
        %v1032 = vpop.f32.mrf.mxu0
        %v1033 = vadd.f32 %v807, %v1032
        %v1034 = vpop.f32.mrf.mxu0
        %v1035 = vpop.f32.mrf.mxu0
        %v1036 = vadd.f32 %v807, %v1035
        %v1037 = vpop.f32.mrf.mxu0
        %1038 = vmatprep.mubr.bf16.mxu0 0
        %1039 = vmatmul.mubr.bf16.gmra.mxu0 %v856
        %v1040 = vpop.f32.mrf.mxu0
        %v1041 = vadd.f32 %v807, %v1040
        %v1042 = vpop.f32.mrf.mxu0
        %v1043 = vpop.f32.mrf.mxu0
        %v1044 = vadd.f32 %v807, %v1043
        %v1045 = vpop.f32.mrf.mxu0
        %1046 = vmatprep.mubr.bf16.mxu0 0
        %1047 = vmatmul.mubr.bf16.gmra.mxu0 %v859
        %v1048 = vpop.f32.mrf.mxu0
        %v1049 = vadd.f32 %v807, %v1048
        %v1050 = vpop.f32.mrf.mxu0
        %v1051 = vpop.f32.mrf.mxu0
        %v1052 = vadd.f32 %v807, %v1051
        %v1053 = vpop.f32.mrf.mxu0
        %1054 = vmatprep.mubr.bf16.mxu0 0
        %1055 = vmatmul.mubr.bf16.gmra.mxu0 %v862
        %v1056 = vpop.f32.mrf.mxu0
        %v1057 = vadd.f32 %v807, %v1056
        %v1058 = vpop.f32.mrf.mxu0
        %v1059 = vpop.f32.mrf.mxu0
        %v1060 = vadd.f32 %v807, %v1059
        %v1061 = vpop.f32.mrf.mxu0
        %1062 = vmatprep.mubr.bf16.mxu0 0
        %1063 = vmatmul.mubr.bf16.gmra.mxu0 %v865
        %v1064 = vpop.f32.mrf.mxu0
        %v1065 = vadd.f32 %v807, %v1064
        %v1066 = vpop.f32.mrf.mxu0
        %v1067 = vpop.f32.mrf.mxu0
        %v1068 = vadd.f32 %v807, %v1067
        %v1069 = vpop.f32.mrf.mxu0
        %1070 = vmatprep.mubr.bf16.mxu0 0
        %1071 = vmatmul.mubr.bf16.gmra.mxu0 %v868
        %v1072 = vpop.f32.mrf.mxu0
        %v1073 = vadd.f32 %v807, %v1072
        %v1074 = vpop.f32.mrf.mxu0
        %v1075 = vpop.f32.mrf.mxu0
        %v1076 = vadd.f32 %v807, %v1075
        %v1077 = vpop.f32.mrf.mxu0
        %1078 = vmatprep.mubr.bf16.mxu0 0
        %1079 = vmatmul.mubr.bf16.gmra.mxu0 %v871
        %v1080 = vpop.f32.mrf.mxu0
        %v1081 = vadd.f32 %v807, %v1080
        %v1082 = vpop.f32.mrf.mxu0
        %v1083 = vpop.f32.mrf.mxu0
        %v1084 = vadd.f32 %v807, %v1083
        %v1085 = vpop.f32.mrf.mxu0
        %1086 = vmatprep.mubr.bf16.mxu0 0
        %1087 = vmatmul.mubr.bf16.gmra.mxu0 %v874
        %v1088 = vpop.f32.mrf.mxu0
        %v1089 = vadd.f32 %v807, %v1088
        %v1090 = vpop.f32.mrf.mxu0
        %v1091 = vpop.f32.mrf.mxu0
        %v1092 = vadd.f32 %v807, %v1091
        %v1093 = vpop.f32.mrf.mxu0
        %1094 = vmatprep.mubr.bf16.mxu0 0
        %1095 = vmatmul.mubr.bf16.gmra.mxu0 %v877
        %v1096 = vpop.f32.mrf.mxu0
        %v1097 = vadd.f32 %v807, %v1096
        %v1098 = vpop.f32.mrf.mxu0
        %v1099 = vpop.f32.mrf.mxu0
        %v1100 = vadd.f32 %v807, %v1099
        %v1101 = vpop.f32.mrf.mxu0
        %1102 = vmatprep.mubr.bf16.mxu0 0
        %1103 = vmatmul.mubr.bf16.gmra.mxu0 %v880
        %v1104 = vpop.f32.mrf.mxu0
        %v1105 = vadd.f32 %v807, %v1104
        %v1106 = vpop.f32.mrf.mxu0
        %v1107 = vpop.f32.mrf.mxu0
        %v1108 = vadd.f32 %v807, %v1107
        %v1109 = vpop.f32.mrf.mxu0
        %1110 = vmatprep.mubr.bf16.mxu0 0
        %1111 = vmatmul.mubr.bf16.gmra.mxu0 %v883
        %v1112 = vpop.f32.mrf.mxu0
        %v1113 = vadd.f32 %v807, %v1112
        %v1114 = vpop.f32.mrf.mxu0
        %v1115 = vpop.f32.mrf.mxu0
        %v1116 = vadd.f32 %v807, %v1115
        %v1117 = vpop.f32.mrf.mxu0
        %1118 = vmatprep.mubr.bf16.mxu0 0
        %1119 = vmatmul.mubr.bf16.gmra.mxu0 %v886
        %v1120 = vpop.f32.mrf.mxu0
        %v1121 = vadd.f32 %v807, %v1120
        %v1122 = vpop.f32.mrf.mxu0
        %v1123 = vpop.f32.mrf.mxu0
        %v1124 = vadd.f32 %v807, %v1123
        %v1125 = vpop.f32.mrf.mxu0
        %1126 = vmatprep.mubr.bf16.mxu0 0
        %1127 = vmatmul.mubr.bf16.gmra.mxu0 %v889
        %v1128 = vpop.f32.mrf.mxu0
        %v1129 = vadd.f32 %v807, %v1128
        %v1130 = vpop.f32.mrf.mxu0
        %v1131 = vpop.f32.mrf.mxu0
        %v1132 = vadd.f32 %v807, %v1131
        %v1133 = vpop.f32.mrf.mxu0
        %1134 = vmatprep.mubr.bf16.mxu0 0
        %1135 = vmatmul.mubr.bf16.gmra.mxu0 %v892
        %v1136 = vpop.f32.mrf.mxu0
        %v1137 = vadd.f32 %v807, %v1136
        %v1138 = vpop.f32.mrf.mxu0
        %v1139 = vpop.f32.mrf.mxu0
        %v1140 = vadd.f32 %v807, %v1139
        %v1141 = vpop.f32.mrf.mxu0
        %1142 = vmatprep.mubr.bf16.mxu0 0
        %1143 = vmatmul.mubr.bf16.gmra.mxu0 %v895
        %v1144 = vpop.f32.mrf.mxu0
        %v1145 = vadd.f32 %v807, %v1144
        %v1146 = vpop.f32.mrf.mxu0
        %v1147 = vpop.f32.mrf.mxu0
        %v1148 = vadd.f32 %v807, %v1147
        %v1149 = vpop.f32.mrf.mxu0
        %1150 = vmatprep.mubr.bf16.mxu0 0
        %1151 = vmatmul.mubr.bf16.gmra.mxu0 %v898
        %v1152 = vpop.f32.mrf.mxu0
        %v1153 = vadd.f32 %v807, %v1152
        %v1154 = vpop.f32.mrf.mxu0
        %v1155 = vpop.f32.mrf.mxu0
        %v1156 = vadd.f32 %v807, %v1155
        %v1157 = vpop.f32.mrf.mxu0
        %1158 = vmatprep.mubr.bf16.mxu0 0
        %1159 = vmatmul.mubr.bf16.gmra.mxu0 %v901
        %v1160 = vpop.f32.mrf.mxu0
        %v1161 = vadd.f32 %v807, %v1160
        %v1162 = vpop.f32.mrf.mxu0
        %v1163 = vpop.f32.mrf.mxu0
        %v1164 = vadd.f32 %v807, %v1163
        %v1165 = vpop.f32.mrf.mxu0
        %1166 = vmatprep.mubr.bf16.mxu0 0
        %1167 = vmatmul.mubr.bf16.gmra.mxu0 %v904
        %v1168 = vpop.f32.mrf.mxu0
        %v1169 = vadd.f32 %v807, %v1168
        %v1170 = vpop.f32.mrf.mxu0
        %v1171 = vpop.f32.mrf.mxu0
        %v1172 = vadd.f32 %v807, %v1171
        %v1173 = vpop.f32.mrf.mxu0
        %1174 = vmatprep.mubr.bf16.mxu0 0
        %1175 = vmatmul.mubr.bf16.gmra.mxu0 %v907
        %v1176 = vpop.f32.mrf.mxu0
        %v1177 = vadd.f32 %v807, %v1176
        %v1178 = vpop.f32.mrf.mxu0
        %v1179 = vpop.f32.mrf.mxu0
        %v1180 = vadd.f32 %v807, %v1179
        %v1181 = vpop.f32.mrf.mxu0
        %1182 = vmatprep.mubr.bf16.mxu0 0
        %1183 = vmatmul.mubr.bf16.gmra.mxu0 %v910
        %v1184 = vpop.f32.mrf.mxu0
        %v1185 = vadd.f32 %v807, %v1184
        %v1186 = vpop.f32.mrf.mxu0
        %v1187 = vpop.f32.mrf.mxu0
        %v1188 = vadd.f32 %v807, %v1187
        %v1189 = vpop.f32.mrf.mxu0
        %1190 = vmatprep.mubr.bf16.mxu0 0
        %1191 = vmatmul.mubr.bf16.gmra.mxu0 %v913
        %v1192 = vpop.f32.mrf.mxu0
        %v1193 = vadd.f32 %v807, %v1192
        %v1194 = vpop.f32.mrf.mxu0
        %v1195 = vpop.f32.mrf.mxu0
        %v1196 = vadd.f32 %v807, %v1195
        %v1197 = vpop.f32.mrf.mxu0
        %1198 = vmatprep.mubr.bf16.mxu0 0
        %1199 = vmatmul.mubr.bf16.gmra.mxu0 %v916
        %v1200 = vpop.f32.mrf.mxu0
        %v1201 = vadd.f32 %v807, %v1200
        %v1202 = vpop.f32.mrf.mxu0
        %v1203 = vpop.f32.mrf.mxu0
        %v1204 = vadd.f32 %v807, %v1203
        %v1205 = vpop.f32.mrf.mxu0
        %1206 = vdwg.mxu0
        %v1207 = vxor.u32 %v953, 2147483648
        %v1208 = vxor.u32 %v956, 2147483648
        %v1209 = vxor.u32 %v961, 2147483648
        %v1210 = vxor.u32 %v964, 2147483648
        %v1211 = vxor.u32 %v969, 2147483648
        %v1212 = vxor.u32 %v972, 2147483648
        %v1213 = vxor.u32 %v977, 2147483648
        %v1214 = vxor.u32 %v980, 2147483648
        %v1215 = vxor.u32 %v985, 2147483648
        %v1216 = vxor.u32 %v988, 2147483648
        %v1217 = vxor.u32 %v993, 2147483648
        %v1218 = vxor.u32 %v996, 2147483648
        %v1219 = vxor.u32 %v1001, 2147483648
        %v1220 = vxor.u32 %v1004, 2147483648
        %v1221 = vxor.u32 %v1009, 2147483648
        %v1222 = vxor.u32 %v1012, 2147483648
        %v1223 = vxor.u32 %v1017, 2147483648
        %v1224 = vxor.u32 %v1020, 2147483648
        %v1225 = vxor.u32 %v1025, 2147483648
        %v1226 = vxor.u32 %v1028, 2147483648
        %v1227 = vxor.u32 %v1033, 2147483648
        %v1228 = vxor.u32 %v1036, 2147483648
        %v1229 = vxor.u32 %v1041, 2147483648
        %v1230 = vxor.u32 %v1044, 2147483648
        %v1231 = vxor.u32 %v1049, 2147483648
        %v1232 = vxor.u32 %v1052, 2147483648
        %v1233 = vxor.u32 %v1057, 2147483648
        %v1234 = vxor.u32 %v1060, 2147483648
        %v1235 = vxor.u32 %v1065, 2147483648
        %v1236 = vxor.u32 %v1068, 2147483648
        %v1237 = vxor.u32 %v1073, 2147483648
        %v1238 = vxor.u32 %v1076, 2147483648
        %v1239 = vxor.u32 %v1081, 2147483648
        %v1240 = vxor.u32 %v1084, 2147483648
        %v1241 = vxor.u32 %v1089, 2147483648
        %v1242 = vxor.u32 %v1092, 2147483648
        %v1243 = vxor.u32 %v1097, 2147483648
        %v1244 = vxor.u32 %v1100, 2147483648
        %v1245 = vxor.u32 %v1105, 2147483648
        %v1246 = vxor.u32 %v1108, 2147483648
        %v1247 = vxor.u32 %v1113, 2147483648
        %v1248 = vxor.u32 %v1116, 2147483648
        %v1249 = vxor.u32 %v1121, 2147483648
        %v1250 = vxor.u32 %v1124, 2147483648
        %v1251 = vxor.u32 %v1129, 2147483648
        %v1252 = vxor.u32 %v1132, 2147483648
        %v1253 = vxor.u32 %v1137, 2147483648
        %v1254 = vxor.u32 %v1140, 2147483648
        %v1255 = vxor.u32 %v1145, 2147483648
        %v1256 = vxor.u32 %v1148, 2147483648
        %v1257 = vxor.u32 %v1153, 2147483648
        %v1258 = vxor.u32 %v1156, 2147483648
        %v1259 = vxor.u32 %v1161, 2147483648
        %v1260 = vxor.u32 %v1164, 2147483648
        %v1261 = vxor.u32 %v1169, 2147483648
        %v1262 = vxor.u32 %v1172, 2147483648
        %v1263 = vxor.u32 %v1177, 2147483648
        %v1264 = vxor.u32 %v1180, 2147483648
        %v1265 = vxor.u32 %v1185, 2147483648
        %v1266 = vxor.u32 %v1188, 2147483648
        %v1267 = vxor.u32 %v1193, 2147483648
        %v1268 = vxor.u32 %v1196, 2147483648
        %v1269 = vxor.u32 %v1201, 2147483648
        %v1270 = vxor.u32 %v1204, 2147483648
        %v1271 = vmul.f32 %v1207, 1.442695
        %v1272 = vpow.pop %v1271
        %v1273 = vmul.f32 %v1208, 1.442695
        %v1274 = vpow.pop %v1273
        %v1275 = vmul.f32 %v1209, 1.442695
        %v1276 = vpow.pop %v1275
        %v1277 = vmul.f32 %v1210, 1.442695
        %v1278 = vpow.pop %v1277
        %v1279 = vmul.f32 %v1211, 1.442695
        %v1280 = vpow.pop %v1279
        %v1281 = vmul.f32 %v1212, 1.442695
        %v1282 = vpow.pop %v1281
        %v1283 = vmul.f32 %v1213, 1.442695
        %v1284 = vpow.pop %v1283
        %v1285 = vmul.f32 %v1214, 1.442695
        %v1286 = vpow.pop %v1285
        %v1287 = vmul.f32 %v1215, 1.442695
        %v1288 = vpow.pop %v1287
        %v1289 = vmul.f32 %v1216, 1.442695
        %v1290 = vpow.pop %v1289
        %v1291 = vmul.f32 %v1217, 1.442695
        %v1292 = vpow.pop %v1291
        %v1293 = vmul.f32 %v1218, 1.442695
        %v1294 = vpow.pop %v1293
        %v1295 = vmul.f32 %v1219, 1.442695
        %v1296 = vpow.pop %v1295
        %v1297 = vmul.f32 %v1220, 1.442695
        %v1298 = vpow.pop %v1297
        %v1299 = vmul.f32 %v1221, 1.442695
        %v1300 = vpow.pop %v1299
        %v1301 = vmul.f32 %v1222, 1.442695
        %v1302 = vpow.pop %v1301
        %v1303 = vmul.f32 %v1223, 1.442695
        %v1304 = vpow.pop %v1303
        %v1305 = vmul.f32 %v1224, 1.442695
        %v1306 = vpow.pop %v1305
        %v1307 = vmul.f32 %v1225, 1.442695
        %v1308 = vpow.pop %v1307
        %v1309 = vmul.f32 %v1226, 1.442695
        %v1310 = vpow.pop %v1309
        %v1311 = vmul.f32 %v1227, 1.442695
        %v1312 = vpow.pop %v1311
        %v1313 = vmul.f32 %v1228, 1.442695
        %v1314 = vpow.pop %v1313
        %v1315 = vmul.f32 %v1229, 1.442695
        %v1316 = vpow.pop %v1315
        %v1317 = vmul.f32 %v1230, 1.442695
        %v1318 = vpow.pop %v1317
        %v1319 = vmul.f32 %v1231, 1.442695
        %v1320 = vpow.pop %v1319
        %v1321 = vmul.f32 %v1232, 1.442695
        %v1322 = vpow.pop %v1321
        %v1323 = vmul.f32 %v1233, 1.442695
        %v1324 = vpow.pop %v1323
        %v1325 = vmul.f32 %v1234, 1.442695
        %v1326 = vpow.pop %v1325
        %v1327 = vmul.f32 %v1235, 1.442695
        %v1328 = vpow.pop %v1327
        %v1329 = vmul.f32 %v1236, 1.442695
        %v1330 = vpow.pop %v1329
        %v1331 = vmul.f32 %v1237, 1.442695
        %v1332 = vpow.pop %v1331
        %v1333 = vmul.f32 %v1238, 1.442695
        %v1334 = vpow.pop %v1333
        %v1335 = vmul.f32 %v1239, 1.442695
        %v1336 = vpow.pop %v1335
        %v1337 = vmul.f32 %v1240, 1.442695
        %v1338 = vpow.pop %v1337
        %v1339 = vmul.f32 %v1241, 1.442695
        %v1340 = vpow.pop %v1339
        %v1341 = vmul.f32 %v1242, 1.442695
        %v1342 = vpow.pop %v1341
        %v1343 = vmul.f32 %v1243, 1.442695
        %v1344 = vpow.pop %v1343
        %v1345 = vmul.f32 %v1244, 1.442695
        %v1346 = vpow.pop %v1345
        %v1347 = vmul.f32 %v1245, 1.442695
        %v1348 = vpow.pop %v1347
        %v1349 = vmul.f32 %v1246, 1.442695
        %v1350 = vpow.pop %v1349
        %v1351 = vmul.f32 %v1247, 1.442695
        %v1352 = vpow.pop %v1351
        %v1353 = vmul.f32 %v1248, 1.442695
        %v1354 = vpow.pop %v1353
        %v1355 = vmul.f32 %v1249, 1.442695
        %v1356 = vpow.pop %v1355
        %v1357 = vmul.f32 %v1250, 1.442695
        %v1358 = vpow.pop %v1357
        %v1359 = vmul.f32 %v1251, 1.442695
        %v1360 = vpow.pop %v1359
        %v1361 = vmul.f32 %v1252, 1.442695
        %v1362 = vpow.pop %v1361
        %v1363 = vmul.f32 %v1253, 1.442695
        %v1364 = vpow.pop %v1363
        %v1365 = vmul.f32 %v1254, 1.442695
        %v1366 = vpow.pop %v1365
        %v1367 = vmul.f32 %v1255, 1.442695
        %v1368 = vpow.pop %v1367
        %v1369 = vmul.f32 %v1256, 1.442695
        %v1370 = vpow.pop %v1369
        %v1371 = vmul.f32 %v1257, 1.442695
        %v1372 = vpow.pop %v1371
        %v1373 = vmul.f32 %v1258, 1.442695
        %v1374 = vpow.pop %v1373
        %v1375 = vmul.f32 %v1259, 1.442695
        %v1376 = vpow.pop %v1375
        %v1377 = vmul.f32 %v1260, 1.442695
        %v1378 = vpow.pop %v1377
        %v1379 = vmul.f32 %v1261, 1.442695
        %v1380 = vpow.pop %v1379
        %v1381 = vmul.f32 %v1262, 1.442695
        %v1382 = vpow.pop %v1381
        %v1383 = vmul.f32 %v1263, 1.442695
        %v1384 = vpow.pop %v1383
        %v1385 = vmul.f32 %v1264, 1.442695
        %v1386 = vpow.pop %v1385
        %v1387 = vmul.f32 %v1265, 1.442695
        %v1388 = vpow.pop %v1387
        %v1389 = vmul.f32 %v1266, 1.442695
        %v1390 = vpow.pop %v1389
        %v1391 = vmul.f32 %v1267, 1.442695
        %v1392 = vpow.pop %v1391
        %v1393 = vmul.f32 %v1268, 1.442695
        %v1394 = vpow.pop %v1393
        %v1395 = vmul.f32 %v1269, 1.442695
        %v1396 = vpow.pop %v1395
        %v1397 = vmul.f32 %v1270, 1.442695
        %v1398 = vpow.pop %v1397
        %v1399 = vadd.f32 %v1272, 1.0
        %v1400 = vadd.f32 %v1274, 1.0
        %v1401 = vadd.f32 %v1276, 1.0
        %v1402 = vadd.f32 %v1278, 1.0
        %v1403 = vadd.f32 %v1280, 1.0
        %v1404 = vadd.f32 %v1282, 1.0
        %v1405 = vadd.f32 %v1284, 1.0
        %v1406 = vadd.f32 %v1286, 1.0
        %v1407 = vadd.f32 %v1288, 1.0
        %v1408 = vadd.f32 %v1290, 1.0
        %v1409 = vadd.f32 %v1292, 1.0
        %v1410 = vadd.f32 %v1294, 1.0
        %v1411 = vadd.f32 %v1296, 1.0
        %v1412 = vadd.f32 %v1298, 1.0
        %v1413 = vadd.f32 %v1300, 1.0
        %v1414 = vadd.f32 %v1302, 1.0
        %v1415 = vadd.f32 %v1304, 1.0
        %v1416 = vadd.f32 %v1306, 1.0
        %v1417 = vadd.f32 %v1308, 1.0
        %v1418 = vadd.f32 %v1310, 1.0
        %v1419 = vadd.f32 %v1312, 1.0
        %v1420 = vadd.f32 %v1314, 1.0
        %v1421 = vadd.f32 %v1316, 1.0
        %v1422 = vadd.f32 %v1318, 1.0
        %v1423 = vadd.f32 %v1320, 1.0
        %v1424 = vadd.f32 %v1322, 1.0
        %v1425 = vadd.f32 %v1324, 1.0
        %v1426 = vadd.f32 %v1326, 1.0
        %v1427 = vadd.f32 %v1328, 1.0
        %v1428 = vadd.f32 %v1330, 1.0
        %v1429 = vadd.f32 %v1332, 1.0
        %v1430 = vadd.f32 %v1334, 1.0
        %v1431 = vadd.f32 %v1336, 1.0
        %v1432 = vadd.f32 %v1338, 1.0
        %v1433 = vadd.f32 %v1340, 1.0
        %v1434 = vadd.f32 %v1342, 1.0
        %v1435 = vadd.f32 %v1344, 1.0
        %v1436 = vadd.f32 %v1346, 1.0
        %v1437 = vadd.f32 %v1348, 1.0
        %v1438 = vadd.f32 %v1350, 1.0
        %v1439 = vadd.f32 %v1352, 1.0
        %v1440 = vadd.f32 %v1354, 1.0
        %v1441 = vadd.f32 %v1356, 1.0
        %v1442 = vadd.f32 %v1358, 1.0
        %v1443 = vadd.f32 %v1360, 1.0
        %v1444 = vadd.f32 %v1362, 1.0
        %v1445 = vadd.f32 %v1364, 1.0
        %v1446 = vadd.f32 %v1366, 1.0
        %v1447 = vadd.f32 %v1368, 1.0
        %v1448 = vadd.f32 %v1370, 1.0
        %v1449 = vadd.f32 %v1372, 1.0
        %v1450 = vadd.f32 %v1374, 1.0
        %v1451 = vadd.f32 %v1376, 1.0
        %v1452 = vadd.f32 %v1378, 1.0
        %v1453 = vadd.f32 %v1380, 1.0
        %v1454 = vadd.f32 %v1382, 1.0
        %v1455 = vadd.f32 %v1384, 1.0
        %v1456 = vadd.f32 %v1386, 1.0
        %v1457 = vadd.f32 %v1388, 1.0
        %v1458 = vadd.f32 %v1390, 1.0
        %v1459 = vadd.f32 %v1392, 1.0
        %v1460 = vadd.f32 %v1394, 1.0
        %v1461 = vadd.f32 %v1396, 1.0
        %v1462 = vadd.f32 %v1398, 1.0
        %v1463 = vrcp.pop %v1399
        %v1464 = vmul.f32 1.0, %v1463
        %v1465 = vrcp.pop %v1400
        %v1466 = vmul.f32 1.0, %v1465
        %v1467 = vrcp.pop %v1401
        %v1468 = vmul.f32 1.0, %v1467
        %v1469 = vrcp.pop %v1402
        %v1470 = vmul.f32 1.0, %v1469
        %v1471 = vrcp.pop %v1403
        %v1472 = vmul.f32 1.0, %v1471
        %v1473 = vrcp.pop %v1404
        %v1474 = vmul.f32 1.0, %v1473
        %v1475 = vrcp.pop %v1405
        %v1476 = vmul.f32 1.0, %v1475
        %v1477 = vrcp.pop %v1406
        %v1478 = vmul.f32 1.0, %v1477
        %v1479 = vrcp.pop %v1407
        %v1480 = vmul.f32 1.0, %v1479
        %v1481 = vrcp.pop %v1408
        %v1482 = vmul.f32 1.0, %v1481
        %v1483 = vrcp.pop %v1409
        %v1484 = vmul.f32 1.0, %v1483
        %v1485 = vrcp.pop %v1410
        %v1486 = vmul.f32 1.0, %v1485
        %v1487 = vrcp.pop %v1411
        %v1488 = vmul.f32 1.0, %v1487
        %v1489 = vrcp.pop %v1412
        %v1490 = vmul.f32 1.0, %v1489
        %v1491 = vrcp.pop %v1413
        %v1492 = vmul.f32 1.0, %v1491
        %v1493 = vrcp.pop %v1414
        %v1494 = vmul.f32 1.0, %v1493
        %v1495 = vrcp.pop %v1415
        %v1496 = vmul.f32 1.0, %v1495
        %v1497 = vrcp.pop %v1416
        %v1498 = vmul.f32 1.0, %v1497
        %v1499 = vrcp.pop %v1417
        %v1500 = vmul.f32 1.0, %v1499
        %v1501 = vrcp.pop %v1418
        %v1502 = vmul.f32 1.0, %v1501
        %v1503 = vrcp.pop %v1419
        %v1504 = vmul.f32 1.0, %v1503
        %v1505 = vrcp.pop %v1420
        %v1506 = vmul.f32 1.0, %v1505
        %v1507 = vrcp.pop %v1421
        %v1508 = vmul.f32 1.0, %v1507
        %v1509 = vrcp.pop %v1422
        %v1510 = vmul.f32 1.0, %v1509
        %v1511 = vrcp.pop %v1423
        %v1512 = vmul.f32 1.0, %v1511
        %v1513 = vrcp.pop %v1424
        %v1514 = vmul.f32 1.0, %v1513
        %v1515 = vrcp.pop %v1425
        %v1516 = vmul.f32 1.0, %v1515
        %v1517 = vrcp.pop %v1426
        %v1518 = vmul.f32 1.0, %v1517
        %v1519 = vrcp.pop %v1427
        %v1520 = vmul.f32 1.0, %v1519
        %v1521 = vrcp.pop %v1428
        %v1522 = vmul.f32 1.0, %v1521
        %v1523 = vrcp.pop %v1429
        %v1524 = vmul.f32 1.0, %v1523
        %v1525 = vrcp.pop %v1430
        %v1526 = vmul.f32 1.0, %v1525
        %v1527 = vrcp.pop %v1431
        %v1528 = vmul.f32 1.0, %v1527
        %v1529 = vrcp.pop %v1432
        %v1530 = vmul.f32 1.0, %v1529
        %v1531 = vrcp.pop %v1433
        %v1532 = vmul.f32 1.0, %v1531
        %v1533 = vrcp.pop %v1434
        %v1534 = vmul.f32 1.0, %v1533
        %v1535 = vrcp.pop %v1435
        %v1536 = vmul.f32 1.0, %v1535
        %v1537 = vrcp.pop %v1436
        %v1538 = vmul.f32 1.0, %v1537
        %v1539 = vrcp.pop %v1437
        %v1540 = vmul.f32 1.0, %v1539
        %v1541 = vrcp.pop %v1438
        %v1542 = vmul.f32 1.0, %v1541
        %v1543 = vrcp.pop %v1439
        %v1544 = vmul.f32 1.0, %v1543
        %v1545 = vrcp.pop %v1440
        %v1546 = vmul.f32 1.0, %v1545
        %v1547 = vrcp.pop %v1441
        %v1548 = vmul.f32 1.0, %v1547
        %v1549 = vrcp.pop %v1442
        %v1550 = vmul.f32 1.0, %v1549
        %v1551 = vrcp.pop %v1443
        %v1552 = vmul.f32 1.0, %v1551
        %v1553 = vrcp.pop %v1444
        %v1554 = vmul.f32 1.0, %v1553
        %v1555 = vrcp.pop %v1445
        %v1556 = vmul.f32 1.0, %v1555
        %v1557 = vrcp.pop %v1446
        %v1558 = vmul.f32 1.0, %v1557
        %v1559 = vrcp.pop %v1447
        %v1560 = vmul.f32 1.0, %v1559
        %v1561 = vrcp.pop %v1448
        %v1562 = vmul.f32 1.0, %v1561
        %v1563 = vrcp.pop %v1449
        %v1564 = vmul.f32 1.0, %v1563
        %v1565 = vrcp.pop %v1450
        %v1566 = vmul.f32 1.0, %v1565
        %v1567 = vrcp.pop %v1451
        %v1568 = vmul.f32 1.0, %v1567
        %v1569 = vrcp.pop %v1452
        %v1570 = vmul.f32 1.0, %v1569
        %v1571 = vrcp.pop %v1453
        %v1572 = vmul.f32 1.0, %v1571
        %v1573 = vrcp.pop %v1454
        %v1574 = vmul.f32 1.0, %v1573
        %v1575 = vrcp.pop %v1455
        %v1576 = vmul.f32 1.0, %v1575
        %v1577 = vrcp.pop %v1456
        %v1578 = vmul.f32 1.0, %v1577
        %v1579 = vrcp.pop %v1457
        %v1580 = vmul.f32 1.0, %v1579
        %v1581 = vrcp.pop %v1458
        %v1582 = vmul.f32 1.0, %v1581
        %v1583 = vrcp.pop %v1459
        %v1584 = vmul.f32 1.0, %v1583
        %v1585 = vrcp.pop %v1460
        %v1586 = vmul.f32 1.0, %v1585
        %v1587 = vrcp.pop %v1461
        %v1588 = vmul.f32 1.0, %v1587
        %v1589 = vrcp.pop %v1462
        %v1590 = vmul.f32 1.0, %v1589
        %1591 = vst [vmem:[%s242] sm:$0xff] %v1464
        %1592 = vst [vmem:[%s242 + $0x8] sm:$0xff] %v1466
        %1593 = vst [vmem:[%s242 + $0x10] sm:$0xff] %v1468
        %1594 = vst [vmem:[%s242 + $0x18] sm:$0xff] %v1470
        %1595 = vst [vmem:[%s242 + $0x20] sm:$0xff] %v1472
        %1596 = vst [vmem:[%s242 + $0x28] sm:$0xff] %v1474
        %1597 = vst [vmem:[%s242 + $0x30] sm:$0xff] %v1476
        %1598 = vst [vmem:[%s242 + $0x38] sm:$0xff] %v1478
        %1599 = vst [vmem:[%s242 + $0x40] sm:$0xff] %v1480
        %1600 = vst [vmem:[%s242 + $0x48] sm:$0xff] %v1482
        %1601 = vst [vmem:[%s242 + $0x50] sm:$0xff] %v1484
        %1602 = vst [vmem:[%s242 + $0x58] sm:$0xff] %v1486
        %1603 = vst [vmem:[%s242 + $0x60] sm:$0xff] %v1488
        %1604 = vst [vmem:[%s242 + $0x68] sm:$0xff] %v1490
        %1605 = vst [vmem:[%s242 + $0x70] sm:$0xff] %v1492
        %1606 = vst [vmem:[%s242 + $0x78] sm:$0xff] %v1494
        %1607 = vst [vmem:[%s242 + $0x80] sm:$0xff] %v1496
        %1608 = vst [vmem:[%s242 + $0x88] sm:$0xff] %v1498
        %1609 = vst [vmem:[%s242 + $0x90] sm:$0xff] %v1500
        %1610 = vst [vmem:[%s242 + $0x98] sm:$0xff] %v1502
        %1611 = vst [vmem:[%s242 + $0xa0] sm:$0xff] %v1504
        %1612 = vst [vmem:[%s242 + $0xa8] sm:$0xff] %v1506
        %1613 = vst [vmem:[%s242 + $0xb0] sm:$0xff] %v1508
        %1614 = vst [vmem:[%s242 + $0xb8] sm:$0xff] %v1510
        %1615 = vst [vmem:[%s242 + $0xc0] sm:$0xff] %v1512
        %1616 = vst [vmem:[%s242 + $0xc8] sm:$0xff] %v1514
        %1617 = vst [vmem:[%s242 + $0xd0] sm:$0xff] %v1516
        %1618 = vst [vmem:[%s242 + $0xd8] sm:$0xff] %v1518
        %1619 = vst [vmem:[%s242 + $0xe0] sm:$0xff] %v1520
        %1620 = vst [vmem:[%s242 + $0xe8] sm:$0xff] %v1522
        %1621 = vst [vmem:[%s242 + $0xf0] sm:$0xff] %v1524
        %1622 = vst [vmem:[%s242 + $0xf8] sm:$0xff] %v1526
        %1623 = vst [vmem:[%s242 + $0x100] sm:$0xff] %v1528
        %1624 = vst [vmem:[%s242 + $0x108] sm:$0xff] %v1530
        %1625 = vst [vmem:[%s242 + $0x110] sm:$0xff] %v1532
        %1626 = vst [vmem:[%s242 + $0x118] sm:$0xff] %v1534
        %1627 = vst [vmem:[%s242 + $0x120] sm:$0xff] %v1536
        %1628 = vst [vmem:[%s242 + $0x128] sm:$0xff] %v1538
        %1629 = vst [vmem:[%s242 + $0x130] sm:$0xff] %v1540
        %1630 = vst [vmem:[%s242 + $0x138] sm:$0xff] %v1542
        %1631 = vst [vmem:[%s242 + $0x140] sm:$0xff] %v1544
        %1632 = vst [vmem:[%s242 + $0x148] sm:$0xff] %v1546
        %1633 = vst [vmem:[%s242 + $0x150] sm:$0xff] %v1548
        %1634 = vst [vmem:[%s242 + $0x158] sm:$0xff] %v1550
        %1635 = vst [vmem:[%s242 + $0x160] sm:$0xff] %v1552
        %1636 = vst [vmem:[%s242 + $0x168] sm:$0xff] %v1554
        %1637 = vst [vmem:[%s242 + $0x170] sm:$0xff] %v1556
        %1638 = vst [vmem:[%s242 + $0x178] sm:$0xff] %v1558
        %1639 = vst [vmem:[%s242 + $0x180] sm:$0xff] %v1560
        %1640 = vst [vmem:[%s242 + $0x188] sm:$0xff] %v1562
        %1641 = vst [vmem:[%s242 + $0x190] sm:$0xff] %v1564
        %1642 = vst [vmem:[%s242 + $0x198] sm:$0xff] %v1566
        %1643 = vst [vmem:[%s242 + $0x1a0] sm:$0xff] %v1568
        %1644 = vst [vmem:[%s242 + $0x1a8] sm:$0xff] %v1570
        %1645 = vst [vmem:[%s242 + $0x1b0] sm:$0xff] %v1572
        %1646 = vst [vmem:[%s242 + $0x1b8] sm:$0xff] %v1574
        %1647 = vst [vmem:[%s242 + $0x1c0] sm:$0xff] %v1576
        %1648 = vst [vmem:[%s242 + $0x1c8] sm:$0xff] %v1578
        %1649 = vst [vmem:[%s242 + $0x1d0] sm:$0xff] %v1580
        %1650 = vst [vmem:[%s242 + $0x1d8] sm:$0xff] %v1582
        %1651 = vst [vmem:[%s242 + $0x1e0] sm:$0xff] %v1584
        %1652 = vst [vmem:[%s242 + $0x1e8] sm:$0xff] %v1586
        %1653 = vst [vmem:[%s242 + $0x1f0] sm:$0xff] %v1588
        %1654 = vst [vmem:[%s242 + $0x1f8] sm:$0xff] %v1590
        %s1655 = sand.u32 %s140, 1
        %s1656 = scalar_lea.sflag [#allocation4], %s1655
        %s1657 = sand.u32 %s140, 1
        %s1658 = smul.addr %s1657, 512
        %s1659 = scalar_lea.vmem [#allocation5], %s1658
        // Predicated region
        $region45: #{tpu_custom_call.1} parent=39 // pred_check
          %p1660 = pneg %p150
        $region46: #{tpu_custom_call.1} parent=39 // pred_check_branch
          %1662 = sbr.rel (%p1660) target = $region48
        $region47: #{tpu_custom_call.1} parent=39 // pred_region
          %s1663 = smul.u32 64, %s22
          %s1665 = ssub.s32 8192, 8192
          %1666 = vsyncadd %s1656, %s1665
          %s1667 = smul.addr %s1663, 128
          %s1668 = scalar_lea.hbm %s5, %s1667
          %s1669 = sshll.u32 %s1659, 4
          %s1670 = int_to_ptr.vmem [resolvable:$true] %s1669
          %1675 = dma.vmem_to_hbm [thread:$0]  %s1670, 8192, %s1668, %s1656, 128, 128, 8
        $region48: #{tpu_custom_call.1} parent=39 // pred_fallthru
          _
      $region40: #{tpu_custom_call.1} parent=5 // pred_fallthru
        _
      %p1676 = scmp.le.s32.totalorder 2, %s17
      // Predicated region
      $region49: #{tpu_custom_call.1} parent=5 // pred_check
        %p1677 = pneg %p1676
      $region50: #{tpu_custom_call.1} parent=5 // pred_check_branch
        %1679 = sbr.rel (%p1677) target = $region52
      $region51: #{tpu_custom_call.1} parent=5 // pred_region
        %s1680 = ssub.s32 %s17, 2
        // Predicated region
        $region53: #{tpu_custom_call.1} parent=51 // pred_check
          %p1681 = pneg %p156
        $region54: #{tpu_custom_call.1} parent=51 // pred_check_branch
          %1683 = sbr.rel (%p1681) target = $region56
        $region55: #{tpu_custom_call.1} parent=51 // pred_region
          %s1684 = sand.u32 %s141, 1
          %s1685 = scalar_lea.sflag [#allocation4], %s1684
          %s1686 = sand.u32 %s141, 1
          %s1687 = smul.addr %s1686, 512
          %s1688 = scalar_lea.vmem [#allocation5], %s1687
          %1689 = dma.done %s1685, 8192
        $region56: #{tpu_custom_call.1} parent=51 // pred_fallthru
          _
      $region52: #{tpu_custom_call.1} parent=5 // pred_fallthru
        _
    $region6: #{tpu_custom_call.1} parent=1 // loop_footer
      %s21 = sadd.s32 1, %s17
    $region7: #{tpu_custom_call.1} parent=1 // loop_footer_branch
      %16 = sbr.rel target = $region3
    $region8: #{tpu_custom_call.1} parent=1 // loop_exit
      _
    %1690 = vsyncpa [#allocation3], 1
    %s1691 = scalar_lea.sflag [#allocation3], 1
    %1692 = vsyncpa %s1691, 1
    %1693 = vsyncpa [#allocation4], 1
    %s1694 = scalar_lea.sflag [#allocation4], 1
    %1695 = vsyncpa %s1694, 1

</llo_original>
